<compile_context>
chip_gen: v6e
topology: v6e:2x2x1
jax: 0.10.0
libtpu: 0.0.40
codegen_flags: <defaults>
</compile_context>

<pallas_src>
import functools

import jax
import jax.numpy as jnp
from jax.experimental import pallas as pl
from jax.experimental.pallas import tpu as pltpu

_EPS = 1e-5          # BatchNorm2d default eps
_NEG_SLOPE = 0.01    # LeakyReLU default negative slope


# --------------------------------------------------------------------------- #
# Small helpers
# --------------------------------------------------------------------------- #
def _round_up(x: int, m: int) -> int:
    return ((x + m - 1) // m) * m


def _pick_tile_p(p: int, cap: int) -> int:
    """Largest multiple-of-128 divisor of P that is <= cap.  Prefers >= 2 (and
    even) grid steps so both v7x TensorCores get work.  Falls back to a single
    full-P tile (block == full array is always legal) when P has no suitable
    divisor."""
    if p % 128 != 0:
        return p
    cap = max(128, min(cap, p))
    d = (cap // 128) * 128
    tp = None
    while d >= 128:
        if p % d == 0:
            tp = d
            break
        d -= 128
    if tp is None:
        return p
    if tp == p and p >= 256 and (p // 2) % 128 == 0:
        tp = p // 2                      # ensure at least 2 grid steps
    if (p // tp) % 2 == 1 and tp % 256 == 0:
        tp //= 2                         # prefer an even grid (v7x megacore)
    return tp


def _interp_matrix_2x(n_in: int) -> jnp.ndarray:
    """(2*n_in, n_in) bilinear x2 interpolation matrix, align_corners=True."""
    n_out = 2 * n_in
    if n_in == 1:
        return jnp.ones((n_out, 1), jnp.float32)
    pos = jnp.arange(n_out, dtype=jnp.float32) * ((n_in - 1) / (n_out - 1))
    lo = jnp.floor(pos)
    frac = pos - lo
    lo_i = lo.astype(jnp.int32)
    hi_i = jnp.minimum(lo_i + 1, n_in - 1)
    cols = jnp.arange(n_in, dtype=jnp.int32)[None, :]
    return ((cols == lo_i[:, None]).astype(jnp.float32) * (1.0 - frac)[:, None]
            + (cols == hi_i[:, None]).astype(jnp.float32) * frac[:, None])


def _upsample_bilinear_2x_align_corners(x_cnhw: jnp.ndarray) -> jnp.ndarray:
    """Gather-free bilinear x2 upsample (align_corners=True) on (C,N,H,W)."""
    _, _, h, w = x_cnhw.shape
    uh = _interp_matrix_2x(h)
    uw = _interp_matrix_2x(w)
    xh = jnp.einsum("oh,cnhw->cnow", uh, x_cnhw,
                    precision=jax.lax.Precision.HIGHEST)
    return jnp.einsum("pw,cnow->cnop", uw, xh,
                      precision=jax.lax.Precision.HIGHEST)


def _im2col_patches_t(sources, pad_vals, kp: int) -> jnp.ndarray:
    """Transposed im2col for a 3x3 / pad=1 conv over channel-concatenated sources.

    sources  : list of (Ci, N, H, W) activations, in torch.cat(dim=1) order.
    pad_vals : per-source spatial pad value, (Ci,) array or None (zero pad).
    kp       : padded contraction size (>= 9*sum(Ci), multiple of 128).

    Returns (kp, N*H*W) bf16.  Rows are tap-major / channel-minor, matching
    w.reshape(9*Cin, Cout) for weights stored as (kh, kw, Cin, Cout); trailing
    kp - 9*Cin rows are zero.  Built entirely in bf16 to halve im2col traffic.
    """
    _, n, h, w = sources[0].shape
    p = n * h * w
    padded = []
    for s, pv in zip(sources, pad_vals):
        s = s.astype(jnp.bfloat16)
        ci = s.shape[0]
        if pv is None:
            sp = jnp.pad(s, ((0, 0), (0, 0), (1, 1), (1, 1)))
        else:
            base = jnp.broadcast_to(pv.astype(jnp.bfloat16)[:, None, None, None],
                                    (ci, n, h + 2, w + 2))
            sp = base.at[:, :, 1:h + 1, 1:w + 1].set(s)
        padded.append(sp)
    rows = []
    for dy in range(3):
        for dx in range(3):
            for sp in padded:
                rows.append(sp[:, :, dy:dy + h, dx:dx + w].reshape(sp.shape[0], p))
    pt = jnp.concatenate(rows, axis=0)               # (9*Cin, P) bf16
    k = pt.shape[0]
    if kp > k:
        pt = jnp.pad(pt, ((0, kp - k), (0, 0)))
    return pt


# --------------------------------------------------------------------------- #
# Pallas kernels
# --------------------------------------------------------------------------- #
def _norm_act_kernel(y_ref, scale_ref, shift_ref, o_ref):
    """BatchNorm affine (precomputed per-channel scale/shift) + LeakyReLU(0.01).

    y_ref (Cout, TP) bf16, scale/shift (Cout, 1) f32, o_ref (Cout, TP) f32.
    Lane-dense (TP multiple of 128) loads and stores; f32 elementwise math.
    """
    t = y_ref[...].astype(jnp.float32) * scale_ref[...] + shift_ref[...]
    o_ref[...] = jnp.where(t > 0, t, _NEG_SLOPE * t).astype(o_ref.dtype)


def conv3x3_stage(sources, pad_vals, w_hwio, *, prenorm=None,
                  patch_budget_bytes=8 << 20):
    """One DoubleConv stage: Conv2d(3x3, pad=1, bias=False) as a single
    (Cout, Kp) x (Kp, TP) bf16 matmul per pixel tile, emitting per-tile
    per-channel BatchNorm partial statistics (f32).

    prenorm: None, or (scale_rows, shift_rows) each (9*Cin,) f32 (tap-major):
    the PREVIOUS stage's BatchNorm affine + LeakyReLU applied to the patch tile
    inside the kernel, before the dot (fuses that stage's norm/act pass here).

    Returns: y_t (Cout, P) bf16 raw conv output (channel-major),
             mean (Cout,), biased var (Cout,) f32 batch statistics of y.
    """
    cin = sum(int(s.shape[0]) for s in sources)
    cout = int(w_hwio.shape[-1])
    assert w_hwio.shape == (3, 3, cin, cout)
    _, n, h, w = sources[0].shape
    p = n * h * w
    k = 9 * cin
    kp = _round_up(k, 128)                                    # MXU/lane aligned

    patches_t = _im2col_patches_t(sources, pad_vals, kp)      # (Kp, P)   bf16
    w_flat = jnp.pad(w_hwio.reshape(k, cout).astype(jnp.float32),
                     ((0, kp - k), (0, 0)))
    w_t = jnp.transpose(w_flat).astype(jnp.bfloat16)          # (Cout, Kp) bf16

    tp = _pick_tile_p(p, max(128, patch_budget_bytes // (kp * 2)))
    nt = p // tp

    # VMEM budget from actual tile sizes (double-buffered patch + y blocks,
    # weights, scale/shift, headroom); clamped so it also fits v7x (64 MiB/TC).
    vmem_need = (2 * (kp * tp * 2) + 2 * (max(cout, 16) * tp * 4)
                 + 2 * (cout * kp * 2) + 4 * (kp * 4) + (2 << 20))
    vmem_limit = int(min(max(2 * vmem_need, 32 << 20), 48 << 20))

    fused = prenorm is not None
    if fused:
        sc_rows, sh_rows = prenorm
        sc_rows = jnp.pad(sc_rows.astype(jnp.float32), (0, kp - k)).reshape(kp, 1)
        sh_rows = jnp.pad(sh_rows.astype(jnp.float32), (0, kp - k)).reshape(kp, 1)

    def kernel(*refs):
        if fused:
            p_ref, w_ref, sc_ref, sh_ref, y_ref, s_ref, q_ref = refs
            # Previous stage's BN affine + LeakyReLU on the patch rows
            # (f32 elementwise math; bf16 only on the MXU operands).
            t = p_ref[...].astype(jnp.float32) * sc_ref[...] + sh_ref[...]
            rhs = jnp.where(t > 0, t, _NEG_SLOPE * t).astype(jnp.bfloat16)
        else:
            p_ref, w_ref, y_ref, s_ref, q_ref = refs
            rhs = p_ref[...]
        acc = jnp.dot(w_ref[...], rhs, preferred_element_type=jnp.float32)
        y_ref[...] = acc.astype(y_ref.dtype)                  # bf16, lane-dense
        s_ref[...] = jnp.sum(acc, axis=1, keepdims=True)[None]
        q_ref[...] = jnp.sum(acc * acc, axis=1, keepdims=True)[None]

    in_specs = [
        pl.BlockSpec((kp, tp), lambda i: (0, i)),     # pipelined patch tiles
        pl.BlockSpec((cout, kp), lambda i: (0, 0)),   # resident weights
    ]
    operands = [patches_t, w_t]
    if fused:
        in_specs += [pl.BlockSpec((kp, 1), lambda i: (0, 0)),
                     pl.BlockSpec((kp, 1), lambda i: (0, 0))]
        operands += [sc_rows, sh_rows]

    y_t, psum, psq = pl.pallas_call(
        kernel,
        out_shape=(
            jax.ShapeDtypeStruct((cout, p), jnp.bfloat16),     # raw conv out
            jax.ShapeDtypeStruct((nt, cout, 1), jnp.float32),  # per-tile sum
            jax.ShapeDtypeStruct((nt, cout, 1), jnp.float32),  # per-tile sumsq
        ),
        grid=(nt,),
        in_specs=in_specs,
        out_specs=[
            pl.BlockSpec((cout, tp), lambda i: (0, i)),
            pl.BlockSpec((1, cout, 1), lambda i: (i, 0, 0)),
            pl.BlockSpec((1, cout, 1), lambda i: (i, 0, 0)),
        ],
        compiler_params=pltpu.CompilerParams(
            dimension_semantics=("parallel",),                 # megacore on v7x
            vmem_limit_bytes=vmem_limit,
        ),
    )(*operands)

    # Tiny reduction of the partials -> batch mean / biased variance (f32).
    mean = jnp.sum(psum[:, :, 0], axis=0) / p
    var = jnp.maximum(jnp.sum(psq[:, :, 0], axis=0) / p - mean * mean, 0.0)
    return y_t, mean, var


def _norm_act(y_t, scale, shift, *, budget_bytes=4 << 20):
    """Final BatchNorm affine + LeakyReLU over (Cout, P): lane-dense tiles,
    tile size picked from a byte budget (not shrunk by any fold factor)."""
    cout, p = y_t.shape
    tp = _pick_tile_p(p, max(128, budget_bytes // (max(cout, 8) * 8)))
    nt = p // tp
    return pl.pallas_call(
        _norm_act_kernel,
        out_shape=jax.ShapeDtypeStruct((cout, p), jnp.float32),
        grid=(nt,),
        in_specs=[
            pl.BlockSpec((cout, tp), lambda i: (0, i)),
            pl.BlockSpec((cout, 1), lambda i: (0, 0)),
            pl.BlockSpec((cout, 1), lambda i: (0, 0)),
        ],
        out_specs=pl.BlockSpec((cout, tp), lambda i: (0, i)),
        compiler_params=pltpu.CompilerParams(dimension_semantics=("parallel",)),
    )(y_t,
      scale.reshape(cout, 1).astype(jnp.float32),
      shift.reshape(cout, 1).astype(jnp.float32))


# --------------------------------------------------------------------------- #
# _Up.forward
# --------------------------------------------------------------------------- #
def up_forward(x_nchw, x_skip_nchw, params, *, patch_budget_bytes=8 << 20):
    """_Up.forward (bilinear=True): x2 bilinear upsample (align_corners=True) ->
    pad/crop to the skip's spatial size -> cat([x_skip, x], dim=1) -> DoubleConv.
    BatchNorm uses batch statistics (training-mode forward)."""
    x = jnp.transpose(x_nchw, (1, 0, 2, 3)).astype(jnp.float32)      # (C,N,H,W)
    xs = jnp.transpose(x_skip_nchw, (1, 0, 2, 3)).astype(jnp.float32)

    x = _upsample_bilinear_2x_align_corners(x)

    # F.pad semantics: negative pads crop (lax.pad supports negative edge pads).
    dh = xs.shape[2] - x.shape[2]
    dw = xs.shape[3] - x.shape[3]
    x = jax.lax.pad(x, jnp.zeros((), x.dtype),
                    ((0, 0, 0), (0, 0, 0),
                     (dh // 2, dh - dh // 2, 0), (dw // 2, dw - dw // 2, 0)))

    _, n, hh, ww = xs.shape

    # Stage 1: conv over cat([x_skip, x]); the concat is folded into the
    # im2col patch rows (no concatenated activation is materialized).
    y1, m1, v1 = conv3x3_stage([xs, x], [None, None], params["w1"],
                               patch_budget_bytes=patch_budget_bytes)
    s1 = params["g1"].astype(jnp.float32) * jax.lax.rsqrt(v1 + _EPS)
    b1 = params["b1"].astype(jnp.float32) - m1 * s1

    # Stage 2: stage-1 BN + LeakyReLU fused into this conv's patch pre-norm.
    # Spatial padding uses the per-channel value v_c with s1*v_c + b1 == 0, so
    # the fused affine+activation maps padded entries back to (~exactly) zero,
    # matching the reference's zero-padding of the activated feature map.
    cmid = y1.shape[0]
    s1_safe = jnp.where(jnp.abs(s1) > 1e-20, s1, 1.0)
    pad1 = jnp.where(jnp.abs(s1) > 1e-20, -b1 / s1_safe, 0.0)
    y1_4d = y1.reshape(cmid, n, hh, ww)
    y2, m2, v2 = conv3x3_stage([y1_4d], [pad1], params["w2"],
                               prenorm=(jnp.tile(s1, 9), jnp.tile(b1, 9)),
                               patch_budget_bytes=patch_budget_bytes)
    s2 = params["g2"].astype(jnp.float32) * jax.lax.rsqrt(v2 + _EPS)
    b2 = params["b2"].astype(jnp.float32) - m2 * s2

    # Final BN + LeakyReLU (module output -> no next conv to fuse into).
    out_t = _norm_act(y2, s2, b2)                     # (Cout, P) f32, lane-dense
    cout = out_t.shape[0]
    return jnp.transpose(out_t.reshape(cout, n, hh, ww), (1, 0, 2, 3))  # -> NCHW


# --------------------------------------------------------------------------- #
# Demo
# --------------------------------------------------------------------------- #
if __name__ == "__main__":
    key = jax.random.PRNGKey(0)
    ks = jax.random.split(key, 8)

    in_channels, out_channels = 8, 4    # _Up(in_channels=8, out_channels=4, bilinear=True)
    mid_channels = in_channels // 2     # DoubleConv mid_channels
    c_x, c_skip = 4, 4                  # c_skip + c_x == in_channels after the concat

    # x at half resolution; x_skip is the encoder skip connection.
    x = jax.random.normal(ks[0], (2, c_x, 8, 8), jnp.float32)
    x_skip = jax.random.normal(ks[1], (2, c_skip, 16, 16), jnp.float32)

    # PyTorch Conv2d weight (Cout,Cin,kh,kw) is stored here directly as (kh,kw,Cin,Cout).
    # TODO(synk): BatchNorm running_mean/running_var buffer updates (a training-mode
    # side effect) are not reproduced; normalization itself uses batch statistics,
    # exactly as the train-mode forward does.
    params = dict(
        w1=0.1 * jax.random.normal(ks[2], (3, 3, in_channels, mid_channels), jnp.float32),
        g1=1.0 + 0.1 * jax.random.normal(ks[3], (mid_channels,), jnp.float32),
        b1=0.1 * jax.random.normal(ks[4], (mid_channels,), jnp.float32),
        w2=0.1 * jax.random.normal(ks[5], (3, 3, mid_channels, out_channels), jnp.float32),
        g2=1.0 + 0.1 * jax.random.normal(ks[6], (out_channels,), jnp.float32),
        b2=0.1 * jax.random.normal(ks[7], (out_channels,), jnp.float32),
    )

    # Small patch budget so the demo exercises a multi-step, pipelined, even grid.
    fwd = jax.jit(functools.partial(up_forward, params=params,
                                    patch_budget_bytes=32 * 1024))
    out = jax.block_until_ready(fwd(x, x_skip))
    assert out.shape == (2, out_channels, 16, 16), out.shape
    assert bool(jnp.all(jnp.isfinite(out)))
    print("KERNEL_OK")
</pallas_src>

<mosaic_0001>
module attributes {stable_mosaic.version = 11 : i64} {
  func.func @kernel(%arg0: i32, %arg1: memref<128x128xbf16, #tpu.memory_space<vmem>>, %arg2: memref<4x128xbf16, #tpu.memory_space<vmem>>, %arg3: memref<4x128xbf16, #tpu.memory_space<vmem>>, %arg4: memref<1x4x1xf32, #tpu.memory_space<vmem>>, %arg5: memref<1x4x1xf32, #tpu.memory_space<vmem>>) attributes {dimension_semantics = [#tpu.dimension_semantics<parallel>], iteration_bounds = array<i64: 4>, scalar_prefetch = 0 : i64, scratch_operands = 0 : i64, tpu.core_type = #tpu.core_type<tc>, window_params = [{transform_indices = @transform_0, window_bounds = array<i64: 128, 128>}, {pipeline_mode = #tpu.pipeline_mode<synchronous>, transform_indices = @transform_1, window_bounds = array<i64: 4, 128>}, {transform_indices = @transform_2, window_bounds = array<i64: 4, 128>}, {transform_indices = @transform_3, window_bounds = array<i64: 1, 4, 1>}, {transform_indices = @transform_4, window_bounds = array<i64: 1, 4, 1>}]} {
    %c0 = arith.constant 0 : index
    %c0_0 = arith.constant 0 : index
    %0 = vector.load %arg1[%c0, %c0_0] : memref<128x128xbf16, #tpu.memory_space<vmem>>, vector<128x128xbf16>
    %c0_1 = arith.constant 0 : index
    %c0_2 = arith.constant 0 : index
    %1 = vector.load %arg2[%c0_1, %c0_2] : memref<4x128xbf16, #tpu.memory_space<vmem>>, vector<4x128xbf16>
    %cst = arith.constant dense<0.000000e+00> : vector<4x128xf32>
    %2 = tpu.matmul %1, %0, %cst {dimension_numbers = #tpu.dot_dimension_numbers<[1], [0], [0], [1], [0, 0, 1, 1], [], []>} : vector<4x128xbf16>, vector<128x128xbf16>, vector<4x128xf32> -> vector<4x128xf32>
    %3 = arith.truncf %2 : vector<4x128xf32> to vector<4x128xbf16>
    %c0_3 = arith.constant 0 : index
    %c0_4 = arith.constant 0 : index
    %4 = vector.load %arg3[%c0_3, %c0_4] : memref<4x128xbf16, #tpu.memory_space<vmem>>, vector<4x128xbf16>
    tpu.vector_store %arg3[%c0_3, %c0_4], %3 {strides = array<i32>} : memref<4x128xbf16, #tpu.memory_space<vmem>>, vector<4x128xbf16>,
    %cst_5 = arith.constant dense<0.000000e+00> : vector<4xf32>
    %5 = vector.multi_reduction <add>, %2, %cst_5 [1] : vector<4x128xf32> to vector<4xf32>
    %6 = vector.shape_cast %5 : vector<4xf32> to vector<4x1xf32>
    %7 = vector.shape_cast %6 : vector<4x1xf32> to vector<1x4x1xf32>
    %c0_6 = arith.constant 0 : index
    %c0_7 = arith.constant 0 : index
    %c0_8 = arith.constant 0 : index
    %8 = vector.load %arg4[%c0_6, %c0_7, %c0_8] : memref<1x4x1xf32, #tpu.memory_space<vmem>>, vector<1x4x1xf32>
    tpu.vector_store %arg4[%c0_6, %c0_7, %c0_8], %7 {strides = array<i32>} : memref<1x4x1xf32, #tpu.memory_space<vmem>>, vector<1x4x1xf32>,
    %9 = arith.mulf %2, %2 : vector<4x128xf32>
    %cst_9 = arith.constant dense<0.000000e+00> : vector<4xf32>
    %10 = vector.multi_reduction <add>, %9, %cst_9 [1] : vector<4x128xf32> to vector<4xf32>
    %11 = vector.shape_cast %10 : vector<4xf32> to vector<4x1xf32>
    %12 = vector.shape_cast %11 : vector<4x1xf32> to vector<1x4x1xf32>
    %c0_10 = arith.constant 0 : index
    %c0_11 = arith.constant 0 : index
    %c0_12 = arith.constant 0 : index
    %13 = vector.load %arg5[%c0_10, %c0_11, %c0_12] : memref<1x4x1xf32, #tpu.memory_space<vmem>>, vector<1x4x1xf32>
    tpu.vector_store %arg5[%c0_10, %c0_11, %c0_12], %12 {strides = array<i32>} : memref<1x4x1xf32, #tpu.memory_space<vmem>>, vector<1x4x1xf32>,
    return
  }
  func.func @transform_0(%arg0: i32) -> (i32, i32) {
    %c0_i32 = arith.constant 0 : i32
    %c0_i32_0 = arith.constant 0 : i32
    return %c0_i32, %arg0 : i32, i32
  }
  func.func @transform_1(%arg0: i32) -> (i32, i32) {
    %c0_i32 = arith.constant 0 : i32
    %c0_i32_0 = arith.constant 0 : i32
    %c0_i32_1 = arith.constant 0 : i32
    return %c0_i32, %c0_i32_0 : i32, i32
  }
  func.func @transform_2(%arg0: i32) -> (i32, i32) {
    %c0_i32 = arith.constant 0 : i32
    %c0_i32_0 = arith.constant 0 : i32
    return %c0_i32, %arg0 : i32, i32
  }
  func.func @transform_3(%arg0: i32) -> (i32, i32, i32) {
    %c0_i32 = arith.constant 0 : i32
    %c0_i32_0 = arith.constant 0 : i32
    %c0_i32_1 = arith.constant 0 : i32
    return %arg0, %c0_i32, %c0_i32_0 : i32, i32, i32
  }
  func.func @transform_4(%arg0: i32) -> (i32, i32, i32) {
    %c0_i32 = arith.constant 0 : i32
    %c0_i32_0 = arith.constant 0 : i32
    %c0_i32_1 = arith.constant 0 : i32
    return %arg0, %c0_i32, %c0_i32_0 : i32, i32, i32
  }
}

module attributes {stable_mosaic.version = 11 : i64} {
  func.func @kernel(%arg0: i32, %arg1: memref<128x128xbf16, #tpu.memory_space<vmem>>, %arg2: memref<4x128xbf16, #tpu.memory_space<vmem>>, %arg3: memref<128x1xf32, #tpu.memory_space<vmem>>, %arg4: memref<128x1xf32, #tpu.memory_space<vmem>>, %arg5: memref<4x128xbf16, #tpu.memory_space<vmem>>, %arg6: memref<1x4x1xf32, #tpu.memory_space<vmem>>, %arg7: memref<1x4x1xf32, #tpu.memory_space<vmem>>) attributes {dimension_semantics = [#tpu.dimension_semantics<parallel>], iteration_bounds = array<i64: 4>, scalar_prefetch = 0 : i64, scratch_operands = 0 : i64, tpu.core_type = #tpu.core_type<tc>, window_params = [{transform_indices = @transform_0, window_bounds = array<i64: 128, 128>}, {pipeline_mode = #tpu.pipeline_mode<synchronous>, transform_indices = @transform_1, window_bounds = array<i64: 4, 128>}, {pipeline_mode = #tpu.pipeline_mode<synchronous>, transform_indices = @transform_2, window_bounds = array<i64: 128, 1>}, {pipeline_mode = #tpu.pipeline_mode<synchronous>, transform_indices = @transform_3, window_bounds = array<i64: 128, 1>}, {transform_indices = @transform_4, window_bounds = array<i64: 4, 128>}, {transform_indices = @transform_5, window_bounds = array<i64: 1, 4, 1>}, {transform_indices = @transform_6, window_bounds = array<i64: 1, 4, 1>}]} {
    %c0 = arith.constant 0 : index
    %c0_0 = arith.constant 0 : index
    %0 = vector.load %arg1[%c0, %c0_0] : memref<128x128xbf16, #tpu.memory_space<vmem>>, vector<128x128xbf16>
    %1 = arith.extf %0 : vector<128x128xbf16> to vector<128x128xf32>
    %c0_1 = arith.constant 0 : index
    %c0_2 = arith.constant 0 : index
    %2 = vector.load %arg3[%c0_1, %c0_2] : memref<128x1xf32, #tpu.memory_space<vmem>>, vector<128x1xf32>
    %3 = vector.broadcast %2 : vector<128x1xf32> to vector<128x128xf32>
    %4 = arith.mulf %1, %3 : vector<128x128xf32>
    %c0_3 = arith.constant 0 : index
    %c0_4 = arith.constant 0 : index
    %5 = vector.load %arg4[%c0_3, %c0_4] : memref<128x1xf32, #tpu.memory_space<vmem>>, vector<128x1xf32>
    %6 = vector.broadcast %5 : vector<128x1xf32> to vector<128x128xf32>
    %7 = arith.addf %4, %6 : vector<128x128xf32>
    %cst = arith.constant 0.000000e+00 : f32
    %8 = vector.broadcast %cst : f32 to vector<128x128xf32>
    %9 = arith.cmpf ogt, %7, %8 : vector<128x128xf32>
    %cst_5 = arith.constant 0.00999999977 : f32
    %10 = vector.broadcast %cst_5 : f32 to vector<128x128xf32>
    %11 = arith.mulf %10, %7 : vector<128x128xf32>
    %12 = arith.select %9, %7, %11 : vector<128x128xi1>, vector<128x128xf32>
    %13 = arith.truncf %12 : vector<128x128xf32> to vector<128x128xbf16>
    %c0_6 = arith.constant 0 : index
    %c0_7 = arith.constant 0 : index
    %14 = vector.load %arg2[%c0_6, %c0_7] : memref<4x128xbf16, #tpu.memory_space<vmem>>, vector<4x128xbf16>
    %cst_8 = arith.constant dense<0.000000e+00> : vector<4x128xf32>
    %15 = tpu.matmul %14, %13, %cst_8 {dimension_numbers = #tpu.dot_dimension_numbers<[1], [0], [0], [1], [0, 0, 1, 1], [], []>} : vector<4x128xbf16>, vector<128x128xbf16>, vector<4x128xf32> -> vector<4x128xf32>
    %16 = arith.truncf %15 : vector<4x128xf32> to vector<4x128xbf16>
    %c0_9 = arith.constant 0 : index
    %c0_10 = arith.constant 0 : index
    %17 = vector.load %arg5[%c0_9, %c0_10] : memref<4x128xbf16, #tpu.memory_space<vmem>>, vector<4x128xbf16>
    tpu.vector_store %arg5[%c0_9, %c0_10], %16 {strides = array<i32>} : memref<4x128xbf16, #tpu.memory_space<vmem>>, vector<4x128xbf16>,
    %cst_11 = arith.constant dense<0.000000e+00> : vector<4xf32>
    %18 = vector.multi_reduction <add>, %15, %cst_11 [1] : vector<4x128xf32> to vector<4xf32>
    %19 = vector.shape_cast %18 : vector<4xf32> to vector<4x1xf32>
    %20 = vector.shape_cast %19 : vector<4x1xf32> to vector<1x4x1xf32>
    %c0_12 = arith.constant 0 : index
    %c0_13 = arith.constant 0 : index
    %c0_14 = arith.constant 0 : index
    %21 = vector.load %arg6[%c0_12, %c0_13, %c0_14] : memref<1x4x1xf32, #tpu.memory_space<vmem>>, vector<1x4x1xf32>
    tpu.vector_store %arg6[%c0_12, %c0_13, %c0_14], %20 {strides = array<i32>} : memref<1x4x1xf32, #tpu.memory_space<vmem>>, vector<1x4x1xf32>,
    %22 = arith.mulf %15, %15 : vector<4x128xf32>
    %cst_15 = arith.constant dense<0.000000e+00> : vector<4xf32>
    %23 = vector.multi_reduction <add>, %22, %cst_15 [1] : vector<4x128xf32> to vector<4xf32>
    %24 = vector.shape_cast %23 : vector<4xf32> to vector<4x1xf32>
    %25 = vector.shape_cast %24 : vector<4x1xf32> to vector<1x4x1xf32>
    %c0_16 = arith.constant 0 : index
    %c0_17 = arith.constant 0 : index
    %c0_18 = arith.constant 0 : index
    %26 = vector.load %arg7[%c0_16, %c0_17, %c0_18] : memref<1x4x1xf32, #tpu.memory_space<vmem>>, vector<1x4x1xf32>
    tpu.vector_store %arg7[%c0_16, %c0_17, %c0_18], %25 {strides = array<i32>} : memref<1x4x1xf32, #tpu.memory_space<vmem>>, vector<1x4x1xf32>,
    return
  }
  func.func @transform_0(%arg0: i32) -> (i32, i32) {
    %c0_i32 = arith.constant 0 : i32
    %c0_i32_0 = arith.constant 0 : i32
    return %c0_i32, %arg0 : i32, i32
  }
  func.func @transform_1(%arg0: i32) -> (i32, i32) {
    %c0_i32 = arith.constant 0 : i32
    %c0_i32_0 = arith.constant 0 : i32
    %c0_i32_1 = arith.constant 0 : i32
    return %c0_i32, %c0_i32_0 : i32, i32
  }
  func.func @transform_2(%arg0: i32) -> (i32, i32) {
    %c0_i32 = arith.constant 0 : i32
    %c0_i32_0 = arith.constant 0 : i32
    %c0_i32_1 = arith.constant 0 : i32
    return %c0_i32, %c0_i32_0 : i32, i32
  }
  func.func @transform_3(%arg0: i32) -> (i32, i32) {
    %c0_i32 = arith.constant 0 : i32
    %c0_i32_0 = arith.constant 0 : i32
    %c0_i32_1 = arith.constant 0 : i32
    return %c0_i32, %c0_i32_0 : i32, i32
  }
  func.func @transform_4(%arg0: i32) -> (i32, i32) {
    %c0_i32 = arith.constant 0 : i32
    %c0_i32_0 = arith.constant 0 : i32
    return %c0_i32, %arg0 : i32, i32
  }
  func.func @transform_5(%arg0: i32) -> (i32, i32, i32) {
    %c0_i32 = arith.constant 0 : i32
    %c0_i32_0 = arith.constant 0 : i32
    %c0_i32_1 = arith.constant 0 : i32
    return %arg0, %c0_i32, %c0_i32_0 : i32, i32, i32
  }
  func.func @transform_6(%arg0: i32) -> (i32, i32, i32) {
    %c0_i32 = arith.constant 0 : i32
    %c0_i32_0 = arith.constant 0 : i32
    %c0_i32_1 = arith.constant 0 : i32
    return %arg0, %c0_i32, %c0_i32_0 : i32, i32, i32
  }
}

module attributes {stable_mosaic.version = 11 : i64} {
  func.func @_norm_act_kernel(%arg0: i32, %arg1: memref<4x256xbf16, #tpu.memory_space<vmem>>, %arg2: memref<4x1xf32, #tpu.memory_space<vmem>>, %arg3: memref<4x1xf32, #tpu.memory_space<vmem>>, %arg4: memref<4x256xf32, #tpu.memory_space<vmem>>) attributes {dimension_semantics = [#tpu.dimension_semantics<parallel>], iteration_bounds = array<i64: 2>, scalar_prefetch = 0 : i64, scratch_operands = 0 : i64, tpu.core_type = #tpu.core_type<tc>, window_params = [{transform_indices = @transform_0, window_bounds = array<i64: 4, 256>}, {pipeline_mode = #tpu.pipeline_mode<synchronous>, transform_indices = @transform_1, window_bounds = array<i64: 4, 1>}, {pipeline_mode = #tpu.pipeline_mode<synchronous>, transform_indices = @transform_2, window_bounds = array<i64: 4, 1>}, {transform_indices = @transform_3, window_bounds = array<i64: 4, 256>}]} {
    %c0 = arith.constant 0 : index
    %c0_0 = arith.constant 0 : index
    %0 = vector.load %arg1[%c0, %c0_0] : memref<4x256xbf16, #tpu.memory_space<vmem>>, vector<4x256xbf16>
    %1 = arith.extf %0 : vector<4x256xbf16> to vector<4x256xf32>
    %c0_1 = arith.constant 0 : index
    %c0_2 = arith.constant 0 : index
    %2 = vector.load %arg2[%c0_1, %c0_2] : memref<4x1xf32, #tpu.memory_space<vmem>>, vector<4x1xf32>
    %3 = vector.broadcast %2 : vector<4x1xf32> to vector<4x256xf32>
    %4 = arith.mulf %1, %3 : vector<4x256xf32>
    %c0_3 = arith.constant 0 : index
    %c0_4 = arith.constant 0 : index
    %5 = vector.load %arg3[%c0_3, %c0_4] : memref<4x1xf32, #tpu.memory_space<vmem>>, vector<4x1xf32>
    %6 = vector.broadcast %5 : vector<4x1xf32> to vector<4x256xf32>
    %7 = arith.addf %4, %6 : vector<4x256xf32>
    %cst = arith.constant 0.000000e+00 : f32
    %8 = vector.broadcast %cst : f32 to vector<4x256xf32>
    %9 = arith.cmpf ogt, %7, %8 : vector<4x256xf32>
    %cst_5 = arith.constant 0.00999999977 : f32
    %10 = vector.broadcast %cst_5 : f32 to vector<4x256xf32>
    %11 = arith.mulf %10, %7 : vector<4x256xf32>
    %12 = arith.select %9, %7, %11 : vector<4x256xi1>, vector<4x256xf32>
    %c0_6 = arith.constant 0 : index
    %c0_7 = arith.constant 0 : index
    %13 = vector.load %arg4[%c0_6, %c0_7] : memref<4x256xf32, #tpu.memory_space<vmem>>, vector<4x256xf32>
    tpu.vector_store %arg4[%c0_6, %c0_7], %12 {strides = array<i32>} : memref<4x256xf32, #tpu.memory_space<vmem>>, vector<4x256xf32>,
    return
  }
  func.func @transform_0(%arg0: i32) -> (i32, i32) {
    %c0_i32 = arith.constant 0 : i32
    %c0_i32_0 = arith.constant 0 : i32
    return %c0_i32, %arg0 : i32, i32
  }
  func.func @transform_1(%arg0: i32) -> (i32, i32) {
    %c0_i32 = arith.constant 0 : i32
    %c0_i32_0 = arith.constant 0 : i32
    %c0_i32_1 = arith.constant 0 : i32
    return %c0_i32, %c0_i32_0 : i32, i32
  }
  func.func @transform_2(%arg0: i32) -> (i32, i32) {
    %c0_i32 = arith.constant 0 : i32
    %c0_i32_0 = arith.constant 0 : i32
    %c0_i32_1 = arith.constant 0 : i32
    return %c0_i32, %c0_i32_0 : i32, i32
  }
  func.func @transform_3(%arg0: i32) -> (i32, i32) {
    %c0_i32 = arith.constant 0 : i32
    %c0_i32_0 = arith.constant 0 : i32
    return %c0_i32, %arg0 : i32, i32
  }
}

</mosaic_0001>

<llo_original>
// kernel: up_forward.3
$region0: #{up_forward.3}
  #allocation0 [shape = 'u32[]', space=smem, size = 0x4, offset = 0x4, fixed_abs, tag = 'smem constant byte address 0x4 - core index']
  #allocation1 [shape = 'u32[144,128]{1,0:T(1,128)}', space=vmem, size = 0x12000, scoped, tag = 'internal scratch']
  %s0 = inlined_call_operand.vmem [shape: bf16[128,512], index: 0, kind: input, shape index: {}]
  %s1 = inlined_call_operand.vmem [shape: bf16[4,128], index: 1, kind: input, shape index: {}]
  %s2 = inlined_call_operand.vmem [shape: bf16[4,512], index: 2, kind: output, shape index: {0}]
  %s3 = inlined_call_operand.vmem [shape: f32[4,4,1], index: 3, kind: output, shape index: {1}]
  %s4 = inlined_call_operand.vmem [shape: f32[4,4,1], index: 4, kind: output, shape index: {2}]
  %5 = xla_tuple %s2, %s3, %s4
  %s6 = sld [smem:[#allocation0]]
  $region98: #{up_forward.3} parent=0
    _
  %s8 = ssub.s32 1, %s6
  %s9 = scalar_select 0, %s8, %s6
  $region1: #{up_forward.3} parent=0
    #allocation2 [shape = 'u8[65536]{0}', space=vmem, size = 0x10000, scoped, tag = 'input window, operand 0']
    loop: start=0, step=1, limit=6
    $region2: #{up_forward.3} parent=1 // loop_pre_header
      _
    $region3: #{up_forward.3} parent=1 // loop_header
      %s11 = sphi 0, %s15
      %p12 = scmp.ge.s32.totalorder %s11, 6
      %s21 = sphi 0, %s23
      %s24 = sphi 0, %s21
      %s25 = sphi 0, %s24
      %s41 = sphi 0, %s25
      %s45 = sphi 0, %s45
      %s47 = sphi 0, %s45
      %s48 = sphi 0, %s47
      %s62 = sphi 0, %s48
      %s68 = sphi 0, %s70
      %s71 = sphi 0, %s68
      %s72 = sphi 0, %s71
      %s88 = sphi 0, %s72
      %s94 = sphi 0, %s96
      %s97 = sphi 0, %s94
      %s98 = sphi 0, %s97
      %s114 = sphi 0, %s98
      %s120 = sphi 0, %s122
      %s123 = sphi 0, %s120
      %s124 = sphi 0, %s123
      %s140 = sphi 0, %s124
    $region4: #{up_forward.3} parent=1 // loop_header_branch
      %14 = sbr.rel (%p12) target = $region8
    $region5: #{up_forward.3} parent=1 // loop_body
      %s16 = ssub.s32 %s11, 1
      %s17 = ssub.s32 %s11, 2
      %s18 = sadd.s32 %s11, 1
      %s19 = ssub.s32 %s11, %s18
      %p20 = scmp.eq.s32.totalorder %s19, 0
      %s22 = sadd.s32 %s21, 1
      %s23 = scalar_select %p20, %s21, %s22
      %p26 = pneg %p20
      %p27 = scmp.eq.s32.totalorder %s11, 3
      %p28 = por %p26, %p27
      %p29 = scmp.ne.s32.totalorder %s21, %s24
      %p30 = scmp.eq.s32.totalorder %s11, 0
      %p31 = por %p29, %p30
      %p32 = scmp.ne.s32.totalorder %s21, %s24
      %p33 = scmp.eq.s32.totalorder %s16, 3
      %p34 = por %p32, %p33
      %p35 = scmp.ne.s32.totalorder %s24, %s25
      %p36 = scmp.eq.s32.totalorder %s16, 0
      %p37 = por %p35, %p36
      %p38 = scmp.ne.s32.totalorder %s24, %s25
      %p39 = scmp.eq.s32.totalorder %s17, 3
      %p40 = por %p38, %p39
      %p42 = scmp.ne.s32.totalorder %s25, %s41
      %p43 = scmp.eq.s32.totalorder %s17, 0
      %p44 = por %p42, %p43
      %s46 = sadd.s32 %s45, 1
      %p49 = scmp.eq.s32.totalorder %s11, 3
      %p50 = scmp.ne.s32.totalorder %s45, %s47
      %p51 = scmp.eq.s32.totalorder %s11, 0
      %p52 = por %p50, %p51
      %p53 = scmp.ne.s32.totalorder %s45, %s47
      %p54 = scmp.eq.s32.totalorder %s16, 3
      %p55 = por %p53, %p54
      %p56 = scmp.ne.s32.totalorder %s47, %s48
      %p57 = scmp.eq.s32.totalorder %s16, 0
      %p58 = por %p56, %p57
      %p59 = scmp.ne.s32.totalorder %s47, %s48
      %p60 = scmp.eq.s32.totalorder %s17, 3
      %p61 = por %p59, %p60
      %p63 = scmp.ne.s32.totalorder %s48, %s62
      %p64 = scmp.eq.s32.totalorder %s17, 0
      %p65 = por %p63, %p64
      %s66 = ssub.s32 %s11, %s18
      %p67 = scmp.eq.s32.totalorder %s66, 0
      %s69 = sadd.s32 %s68, 1
      %s70 = scalar_select %p67, %s68, %s69
      %p73 = pneg %p67
      %p74 = scmp.eq.s32.totalorder %s11, 3
      %p75 = por %p73, %p74
      %p76 = scmp.ne.s32.totalorder %s68, %s71
      %p77 = scmp.eq.s32.totalorder %s11, 0
      %p78 = por %p76, %p77
      %p79 = scmp.ne.s32.totalorder %s68, %s71
      %p80 = scmp.eq.s32.totalorder %s16, 3
      %p81 = por %p79, %p80
      %p82 = scmp.ne.s32.totalorder %s71, %s72
      %p83 = scmp.eq.s32.totalorder %s16, 0
      %p84 = por %p82, %p83
      %p85 = scmp.ne.s32.totalorder %s71, %s72
      %p86 = scmp.eq.s32.totalorder %s17, 3
      %p87 = por %p85, %p86
      %p89 = scmp.ne.s32.totalorder %s72, %s88
      %p90 = scmp.eq.s32.totalorder %s17, 0
      %p91 = por %p89, %p90
      %s92 = ssub.s32 %s11, %s18
      %p93 = scmp.eq.s32.totalorder %s92, 0
      %s95 = sadd.s32 %s94, 1
      %s96 = scalar_select %p93, %s94, %s95
      %p99 = pneg %p93
      %p100 = scmp.eq.s32.totalorder %s11, 3
      %p101 = por %p99, %p100
      %p102 = scmp.ne.s32.totalorder %s94, %s97
      %p103 = scmp.eq.s32.totalorder %s11, 0
      %p104 = por %p102, %p103
      %p105 = scmp.ne.s32.totalorder %s94, %s97
      %p106 = scmp.eq.s32.totalorder %s16, 3
      %p107 = por %p105, %p106
      %p108 = scmp.ne.s32.totalorder %s97, %s98
      %p109 = scmp.eq.s32.totalorder %s16, 0
      %p110 = por %p108, %p109
      %p111 = scmp.ne.s32.totalorder %s97, %s98
      %p112 = scmp.eq.s32.totalorder %s17, 3
      %p113 = por %p111, %p112
      %p115 = scmp.ne.s32.totalorder %s98, %s114
      %p116 = scmp.eq.s32.totalorder %s17, 0
      %p117 = por %p115, %p116
      %s118 = ssub.s32 %s11, %s18
      %p119 = scmp.eq.s32.totalorder %s118, 0
      %s121 = sadd.s32 %s120, 1
      %s122 = scalar_select %p119, %s120, %s121
      %p125 = pneg %p119
      %p126 = scmp.eq.s32.totalorder %s11, 3
      %p127 = por %p125, %p126
      %p128 = scmp.ne.s32.totalorder %s120, %s123
      %p129 = scmp.eq.s32.totalorder %s11, 0
      %p130 = por %p128, %p129
      %p131 = scmp.ne.s32.totalorder %s120, %s123
      %p132 = scmp.eq.s32.totalorder %s16, 3
      %p133 = por %p131, %p132
      %p134 = scmp.ne.s32.totalorder %s123, %s124
      %p135 = scmp.eq.s32.totalorder %s16, 0
      %p136 = por %p134, %p135
      %p137 = scmp.ne.s32.totalorder %s123, %s124
      %p138 = scmp.eq.s32.totalorder %s17, 3
      %p139 = por %p137, %p138
      %p141 = scmp.ne.s32.totalorder %s124, %s140
      %p142 = scmp.eq.s32.totalorder %s17, 0
      %p143 = por %p141, %p142
      %p144 = scmp.le.s32.totalorder 1, %s11
      %p145 = scmp.lt.s32.totalorder %s11, 5
      %p146 = pnand %p144, %p145
      %p147 = pneg %p146
      // Predicated region
      $region9: #{up_forward.3} parent=5 // pred_check
        _
      $region10: #{up_forward.3} parent=5 // pred_check_branch
        %149 = sbr.rel (%p146) target = $region12
      $region11: #{up_forward.3} parent=5 // pred_region
        %s150 = ssub.s32 %s11, 1
        // Predicated region
        $region13: #{up_forward.3} parent=11 // pred_check
          %p151 = pneg %p58
        $region14: #{up_forward.3} parent=11 // pred_check_branch
          %153 = sbr.rel (%p151) target = $region16
        $region15: #{up_forward.3} parent=11 // pred_region
          _
        $region16: #{up_forward.3} parent=11 // pred_fallthru
          _
      $region12: #{up_forward.3} parent=5 // pred_fallthru
        _
      %p154 = scmp.lt.s32.totalorder %s11, 4
      // Predicated region
      $region17: #{up_forward.3} parent=5 // pred_check
        %p155 = pneg %p154
      $region18: #{up_forward.3} parent=5 // pred_check_branch
        %157 = sbr.rel (%p155) target = $region20
      $region19: #{up_forward.3} parent=5 // pred_region
        // Predicated region
        $region21: #{up_forward.3} parent=19 // pred_check
          %p158 = pneg %p31
        $region22: #{up_forward.3} parent=19 // pred_check_branch
          %160 = sbr.rel (%p158) target = $region24
        $region23: #{up_forward.3} parent=19 // pred_region
          %s161 = sand.u32 %s21, 1
          %s162 = sand.u32 %s21, 1
          %s163 = smul.addr %s162, 64
          %s164 = scalar_lea.vmem [#allocation2], %s163
          %s165 = smul.addr %s11, 4
          %s166 = scalar_lea.vmem %s0, %s165
          // Predicated region
          $region25: #{up_forward.3} parent=23 // pred_check
            _
          $region26: #{up_forward.3} parent=23 // pred_check_branch
            %168 = sbr.rel (0) target = $region28
          $region27: #{up_forward.3} parent=23 // pred_region
            // Predicated region
            $region29: #{up_forward.3} parent=27 // pred_check
              _
            $region30: #{up_forward.3} parent=27 // pred_check_branch
              %170 = sbr.rel target = $region32
            $region31: #{up_forward.3} parent=27 // pred_region
              // Predicated region
              $region44: #{up_forward.3} parent=31 // pred_check
                _
              $region45: #{up_forward.3} parent=31 // pred_check_branch
                %216 = sbr.rel (0) target = $region47
              $region46: #{up_forward.3} parent=31 // pred_region
                loop: start=0, step=1, limit=1
                $region48: #{up_forward.3} parent=46 // loop_pre_header
                  _
                $region49: #{up_forward.3} parent=46 // loop_header
                  %s218 = sphi 0, %s222
                  %p219 = scmp.ge.s32.totalorder %s218, 1
                  %s223 = sphi %s166, %s166
                  %s224 = sphi %s164, %s164
                $region50: #{up_forward.3} parent=46 // loop_header_branch
                  %221 = sbr.rel (%p219) target = $region54
                $region51: #{up_forward.3} parent=46 // loop_body
                  _
                $region52: #{up_forward.3} parent=46 // loop_footer
                  %s222 = sadd.s32 1, %s218
                $region53: #{up_forward.3} parent=46 // loop_footer_branch
                  %217 = sbr.rel target = $region49
                $region54: #{up_forward.3} parent=46 // loop_exit
                  _
                %s226 = ssub.s32 16, 1
                loop: start=0, step=1, limit=1
                $region55: #{up_forward.3} parent=46 // loop_pre_header
                  _
                $region56: #{up_forward.3} parent=46 // loop_header
                  %s228 = sphi 0, %s232
                  %p229 = scmp.ge.s32.totalorder %s228, 1
                  %s233 = sphi %s166, %s166
                  %s234 = sphi %s164, %s164
                $region57: #{up_forward.3} parent=46 // loop_header_branch
                  %231 = sbr.rel (%p229) target = $region61
                $region58: #{up_forward.3} parent=46 // loop_body
                  %v235 = vld [vmem:[%s233] sm:%s226]
                  %236 = vst [vmem:[%s234] sm:%s226] %v235
                  %v237 = vld [vmem:[%s233 + $0x10] sm:%s226]
                  %238 = vst [vmem:[%s234 + $0x4] sm:%s226] %v237
                  %v239 = vld [vmem:[%s233 + $0x20] sm:%s226]
                  %240 = vst [vmem:[%s234 + $0x8] sm:%s226] %v239
                  %v241 = vld [vmem:[%s233 + $0x30] sm:%s226]
                  %242 = vst [vmem:[%s234 + $0xc] sm:%s226] %v241
                  %v243 = vld [vmem:[%s233 + $0x40] sm:%s226]
                  %244 = vst [vmem:[%s234 + $0x10] sm:%s226] %v243
                  %v245 = vld [vmem:[%s233 + $0x50] sm:%s226]
                  %246 = vst [vmem:[%s234 + $0x14] sm:%s226] %v245
                  %v247 = vld [vmem:[%s233 + $0x60] sm:%s226]
                  %248 = vst [vmem:[%s234 + $0x18] sm:%s226] %v247
                  %v249 = vld [vmem:[%s233 + $0x70] sm:%s226]
                  %250 = vst [vmem:[%s234 + $0x1c] sm:%s226] %v249
                  %v251 = vld [vmem:[%s233 + $0x80] sm:%s226]
                  %252 = vst [vmem:[%s234 + $0x20] sm:%s226] %v251
                  %v253 = vld [vmem:[%s233 + $0x90] sm:%s226]
                  %254 = vst [vmem:[%s234 + $0x24] sm:%s226] %v253
                  %v255 = vld [vmem:[%s233 + $0xa0] sm:%s226]
                  %256 = vst [vmem:[%s234 + $0x28] sm:%s226] %v255
                  %v257 = vld [vmem:[%s233 + $0xb0] sm:%s226]
                  %258 = vst [vmem:[%s234 + $0x2c] sm:%s226] %v257
                  %v259 = vld [vmem:[%s233 + $0xc0] sm:%s226]
                  %260 = vst [vmem:[%s234 + $0x30] sm:%s226] %v259
                  %v261 = vld [vmem:[%s233 + $0xd0] sm:%s226]
                  %262 = vst [vmem:[%s234 + $0x34] sm:%s226] %v261
                  %v263 = vld [vmem:[%s233 + $0xe0] sm:%s226]
                  %264 = vst [vmem:[%s234 + $0x38] sm:%s226] %v263
                  %v265 = vld [vmem:[%s233 + $0xf0] sm:%s226]
                  %266 = vst [vmem:[%s234 + $0x3c] sm:%s226] %v265
                $region59: #{up_forward.3} parent=46 // loop_footer
                  %s232 = sadd.s32 1, %s228
                $region60: #{up_forward.3} parent=46 // loop_footer_branch
                  %227 = sbr.rel target = $region56
                $region61: #{up_forward.3} parent=46 // loop_exit
                  _
              $region47: #{up_forward.3} parent=31 // pred_fallthru
                _
            $region32: #{up_forward.3} parent=27 // pred_fallthru
              _
            // Predicated region
            $region33: #{up_forward.3} parent=27 // pred_check
              _
            $region34: #{up_forward.3} parent=27 // pred_check_branch
              %172 = sbr.rel (0) target = $region36
            $region35: #{up_forward.3} parent=27 // pred_region
              %s174 = ssub.s32 16, 1
              loop: start=0, step=1, limit=1
              $region37: #{up_forward.3} parent=35 // loop_pre_header
                _
              $region38: #{up_forward.3} parent=35 // loop_header
                %s176 = sphi 0, %s180
                %p177 = scmp.ge.s32.totalorder %s176, 1
                %s181 = sphi %s166, %s166
                %s182 = sphi %s164, %s164
              $region39: #{up_forward.3} parent=35 // loop_header_branch
                %179 = sbr.rel (%p177) target = $region43
              $region40: #{up_forward.3} parent=35 // loop_body
                %v183 = vld [vmem:[%s181] sm:%s174]
                %184 = vst [vmem:[%s182] sm:%s174] %v183
                %v185 = vld [vmem:[%s181 + $0x10] sm:%s174]
                %186 = vst [vmem:[%s182 + $0x4] sm:%s174] %v185
                %v187 = vld [vmem:[%s181 + $0x20] sm:%s174]
                %188 = vst [vmem:[%s182 + $0x8] sm:%s174] %v187
                %v189 = vld [vmem:[%s181 + $0x30] sm:%s174]
                %190 = vst [vmem:[%s182 + $0xc] sm:%s174] %v189
                %v191 = vld [vmem:[%s181 + $0x40] sm:%s174]
                %192 = vst [vmem:[%s182 + $0x10] sm:%s174] %v191
                %v193 = vld [vmem:[%s181 + $0x50] sm:%s174]
                %194 = vst [vmem:[%s182 + $0x14] sm:%s174] %v193
                %v195 = vld [vmem:[%s181 + $0x60] sm:%s174]
                %196 = vst [vmem:[%s182 + $0x18] sm:%s174] %v195
                %v197 = vld [vmem:[%s181 + $0x70] sm:%s174]
                %198 = vst [vmem:[%s182 + $0x1c] sm:%s174] %v197
                %v199 = vld [vmem:[%s181 + $0x80] sm:%s174]
                %200 = vst [vmem:[%s182 + $0x20] sm:%s174] %v199
                %v201 = vld [vmem:[%s181 + $0x90] sm:%s174]
                %202 = vst [vmem:[%s182 + $0x24] sm:%s174] %v201
                %v203 = vld [vmem:[%s181 + $0xa0] sm:%s174]
                %204 = vst [vmem:[%s182 + $0x28] sm:%s174] %v203
                %v205 = vld [vmem:[%s181 + $0xb0] sm:%s174]
                %206 = vst [vmem:[%s182 + $0x2c] sm:%s174] %v205
                %v207 = vld [vmem:[%s181 + $0xc0] sm:%s174]
                %208 = vst [vmem:[%s182 + $0x30] sm:%s174] %v207
                %v209 = vld [vmem:[%s181 + $0xd0] sm:%s174]
                %210 = vst [vmem:[%s182 + $0x34] sm:%s174] %v209
                %v211 = vld [vmem:[%s181 + $0xe0] sm:%s174]
                %212 = vst [vmem:[%s182 + $0x38] sm:%s174] %v211
                %v213 = vld [vmem:[%s181 + $0xf0] sm:%s174]
                %214 = vst [vmem:[%s182 + $0x3c] sm:%s174] %v213
              $region41: #{up_forward.3} parent=35 // loop_footer
                %s180 = sadd.s32 1, %s176
              $region42: #{up_forward.3} parent=35 // loop_footer_branch
                %175 = sbr.rel target = $region38
              $region43: #{up_forward.3} parent=35 // loop_exit
                _
            $region36: #{up_forward.3} parent=27 // pred_fallthru
              _
          $region28: #{up_forward.3} parent=23 // pred_fallthru
            _
          %267 = vnop
        $region24: #{up_forward.3} parent=19 // pred_fallthru
          _
      $region20: #{up_forward.3} parent=5 // pred_fallthru
        _
      %p268 = scmp.le.s32.totalorder 1, %s11
      %p269 = scmp.lt.s32.totalorder %s11, 5
      %p270 = pnand %p268, %p269
      %p271 = pneg %p270
      // Predicated region
      $region62: #{up_forward.3} parent=5 // pred_check
        _
      $region63: #{up_forward.3} parent=5 // pred_check_branch
        %273 = sbr.rel (%p270) target = $region65
      $region64: #{up_forward.3} parent=5 // pred_region
        %s274 = ssub.s32 %s11, 1
        %s275 = sand.u32 %s24, 1
        %s276 = sand.u32 %s24, 1
        %s277 = smul.addr %s276, 64
        %s278 = scalar_lea.vmem [#allocation2], %s277
        // Predicated region
        $region66: #{up_forward.3} parent=64 // pred_check
          %p279 = pneg %p37
        $region67: #{up_forward.3} parent=64 // pred_check_branch
          %281 = sbr.rel (%p279) target = $region69
        $region68: #{up_forward.3} parent=64 // pred_region
          _
        $region69: #{up_forward.3} parent=64 // pred_fallthru
          _
        %s282 = sand.u32 %s24, 1
        %s283 = sand.u32 %s24, 1
        %s284 = smul.addr %s283, 64
        %s285 = scalar_lea.vmem [#allocation2], %s284
        %p286 = pneg %p37
        %p287 = pneg %p34
        %p288 = pneg %p58
        %p289 = pneg %p55
        %p290 = pneg %p84
        %p291 = pneg %p81
        %p292 = scmp.lt.s32.totalorder %s16, 3
        %s293 = scalar_select %p292, %s16, 3
        %s294 = smul.addr %s293, 2
        %s295 = scalar_lea.vmem %s2, %s294
        %p296 = pneg %p110
        %p297 = pneg %p107
        %p298 = scmp.lt.s32.totalorder %s16, 3
        %s299 = scalar_select %p298, %s16, 3
        %s300 = smul.addr %s299, 4
        %s301 = scalar_lea.vmem %s3, %s300
        %p302 = pneg %p136
        %p303 = pneg %p133
        %p304 = scmp.lt.s32.totalorder %s16, 3
        %s305 = scalar_select %p304, %s16, 3
        %s306 = smul.addr %s305, 4
        %s307 = scalar_lea.vmem %s4, %s306
        %p308 = scmp.lt.s32.totalorder %s16, 3
        %s309 = scalar_select %p308, %s16, 3
        %s310 = smul.addr %s309, 2
        %s311 = scalar_lea.vmem %s2, %s310
        %p312 = scmp.lt.s32.totalorder %s16, 3
        %s313 = scalar_select %p312, %s16, 3
        %s314 = smul.addr %s313, 4
        %s315 = scalar_lea.vmem %s3, %s314
        %p316 = scmp.lt.s32.totalorder %s16, 3
        %s317 = scalar_select %p316, %s16, 3
        %s318 = smul.addr %s317, 4
        %s319 = scalar_lea.vmem %s4, %s318
        %v321 = vld [vmem:[%s278] sm:$0xf]
        %v322 = vld [vmem:[%s278 + $0x4] sm:$0xf]
        %v323 = vld [vmem:[%s278 + $0x8] sm:$0xf]
        %v324 = vld [vmem:[%s278 + $0xc] sm:$0xf]
        %v325 = vld [vmem:[%s278 + $0x10] sm:$0xf]
        %v326 = vld [vmem:[%s278 + $0x14] sm:$0xf]
        %v327 = vld [vmem:[%s278 + $0x18] sm:$0xf]
        %v328 = vld [vmem:[%s278 + $0x1c] sm:$0xf]
        %v329 = vld [vmem:[%s278 + $0x20] sm:$0xf]
        %v330 = vld [vmem:[%s278 + $0x24] sm:$0xf]
        %v331 = vld [vmem:[%s278 + $0x28] sm:$0xf]
        %v332 = vld [vmem:[%s278 + $0x2c] sm:$0xf]
        %v333 = vld [vmem:[%s278 + $0x30] sm:$0xf]
        %v334 = vld [vmem:[%s278 + $0x34] sm:$0xf]
        %v335 = vld [vmem:[%s278 + $0x38] sm:$0xf]
        %v336 = vld [vmem:[%s278 + $0x3c] sm:$0xf]
        %v337 = vld [vmem:[%s1] sm:$0x3]
        %v354 = vunpack.c.l.b16 %v321
        %v355 = vunpack.c.l.b16 %v322
        %v356 = vunpack.c.l.b16 %v323
        %v357 = vunpack.c.l.b16 %v324
        %v358 = vunpack.c.l.b16 %v325
        %v359 = vunpack.c.l.b16 %v326
        %v360 = vunpack.c.l.b16 %v327
        %v361 = vunpack.c.l.b16 %v328
        %v362 = vunpack.c.l.b16 %v329
        %v363 = vunpack.c.l.b16 %v330
        %v364 = vunpack.c.l.b16 %v331
        %v365 = vunpack.c.l.b16 %v332
        %v366 = vunpack.c.l.b16 %v333
        %v367 = vunpack.c.l.b16 %v334
        %v368 = vunpack.c.l.b16 %v335
        %v369 = vunpack.c.l.b16 %v336
        %v370 = vpack.c.b16 %v355, %v354
        %v371 = vpack.c.b16 %v357, %v356
        %v372 = vpack.c.b16 %v359, %v358
        %v373 = vpack.c.b16 %v361, %v360
        %v374 = vpack.c.b16 %v363, %v362
        %v375 = vpack.c.b16 %v365, %v364
        %v376 = vpack.c.b16 %v367, %v366
        %v377 = vpack.c.b16 %v369, %v368
        %386 = vmatprep.subr.bf16.mxu0 0
        %387 = vmatpush1.bf16.msra.mxu0 %v377
        %388 = vmatprep.subr.bf16.mxu0 0
        %389 = vmatpush1.bf16.msra.mxu0 %v376
        %390 = vmatprep.subr.bf16.mxu0 0
        %391 = vmatpush1.bf16.msra.mxu0 %v375
        %392 = vmatprep.subr.bf16.mxu0 0
        %393 = vmatpush1.bf16.msra.mxu0 %v374
        %394 = vmatprep.subr.bf16.mxu0 0
        %395 = vmatpush1.bf16.msra.mxu0 %v373
        %396 = vmatprep.subr.bf16.mxu0 0
        %397 = vmatpush1.bf16.msra.mxu0 %v372
        %398 = vmatprep.subr.bf16.mxu0 0
        %399 = vmatpush1.bf16.msra.mxu0 %v371
        %400 = vmatprep.subr.bf16.mxu0 0
        %401 = vmatpush1.bf16.msra.mxu0 %v370
        %402 = vmatprep.subr.bf16.mxu0 0
        %403 = vmatpush2.bf16.msra.mxu0 0
        %404 = vmatprep.subr.bf16.mxu0 0
        %405 = vmatpush2.bf16.msra.mxu0 0
        %406 = vmatprep.subr.bf16.mxu0 0
        %407 = vmatpush2.bf16.msra.mxu0 0
        %408 = vmatprep.subr.bf16.mxu0 0
        %409 = vmatpush2.bf16.msra.mxu0 0
        %410 = vmatprep.subr.bf16.mxu0 0
        %411 = vmatpush2.bf16.msra.mxu0 0
        %412 = vmatprep.subr.bf16.mxu0 0
        %413 = vmatpush2.bf16.msra.mxu0 0
        %414 = vmatprep.subr.bf16.mxu0 0
        %415 = vmatpush2.bf16.msra.mxu0 0
        %416 = vmatprep.subr.bf16.mxu0 0
        %417 = vmatpush2.bf16.msra.mxu0 0
        %418 = vmatprep.mubr.bf16.mxu0 0
        %419 = vmatmul.mubr.bf16.gmra.mxu0 %v337
        %v420 = vpop.f32.mrf.mxu0
        %v421 = vadd.f32 0.0, %v420
        %v422 = vpop.f32.mrf.mxu0
        %v423 = vpop.f32.mrf.mxu0
        %v424 = vpop.f32.mrf.mxu0
        %425 = vdwg.mxu0
        %v426 = vpack.c.bf16 %v421, %v421
        %427 = vst [vmem:[%s311] sm:$0x3] %v426
        %vm428 = vcmask 1043456
        %v429 = vsel %vm428, %v421, 0.0
        %430 = vadd.xlane.f32.xlu0 %v429
        %v431 = vpop.xlane.xlu0 %430
        %vm432 = vcmask 3072
        %433 = vst.msk [vmem:[%s315] sm:$0xf] %vm432, %v431
        %v434 = vmul.f32 %v421, %v421
        %v435 = vsel %vm428, %v434, 0.0
        %436 = vadd.xlane.f32.xlu0 %v435
        %v437 = vpop.xlane.xlu0 %436
        %438 = vst.msk [vmem:[%s319] sm:$0xf] %vm432, %v437
        %p439 = scmp.lt.s32.totalorder %s16, 3
        %s440 = scalar_select %p439, %s16, 3
        %s441 = smul.addr %s440, 2
        %s442 = scalar_lea.vmem %s2, %s441
        %p443 = scmp.lt.s32.totalorder %s16, 3
        %s444 = scalar_select %p443, %s16, 3
        %s445 = smul.addr %s444, 4
        %s446 = scalar_lea.vmem %s3, %s445
        %p447 = scmp.lt.s32.totalorder %s16, 3
        %s448 = scalar_select %p447, %s16, 3
        %s449 = smul.addr %s448, 4
        %s450 = scalar_lea.vmem %s4, %s449
        // Predicated region
        $region70: #{up_forward.3} parent=64 // pred_check
          %p451 = pneg %p81
        $region71: #{up_forward.3} parent=64 // pred_check_branch
          %453 = sbr.rel (%p451) target = $region73
        $region72: #{up_forward.3} parent=64 // pred_region
          _
        $region73: #{up_forward.3} parent=64 // pred_fallthru
          _
        // Predicated region
        $region74: #{up_forward.3} parent=64 // pred_check
          %p454 = pneg %p107
        $region75: #{up_forward.3} parent=64 // pred_check_branch
          %456 = sbr.rel (%p454) target = $region77
        $region76: #{up_forward.3} parent=64 // pred_region
          _
        $region77: #{up_forward.3} parent=64 // pred_fallthru
          _
        // Predicated region
        $region78: #{up_forward.3} parent=64 // pred_check
          %p457 = pneg %p133
        $region79: #{up_forward.3} parent=64 // pred_check_branch
          %459 = sbr.rel (%p457) target = $region81
        $region80: #{up_forward.3} parent=64 // pred_region
          _
        $region81: #{up_forward.3} parent=64 // pred_fallthru
          _
      $region65: #{up_forward.3} parent=5 // pred_fallthru
        _
      %p460 = scmp.le.s32.totalorder 2, %s11
      // Predicated region
      $region82: #{up_forward.3} parent=5 // pred_check
        %p461 = pneg %p460
      $region83: #{up_forward.3} parent=5 // pred_check_branch
        %463 = sbr.rel (%p461) target = $region85
      $region84: #{up_forward.3} parent=5 // pred_region
        %s464 = ssub.s32 %s11, 2
        // Predicated region
        $region86: #{up_forward.3} parent=84 // pred_check
          %p465 = pneg %p87
        $region87: #{up_forward.3} parent=84 // pred_check_branch
          %467 = sbr.rel (%p465) target = $region89
        $region88: #{up_forward.3} parent=84 // pred_region
          %p468 = scmp.lt.s32.totalorder %s17, 3
          %s469 = scalar_select %p468, %s17, 3
          %s470 = smul.addr %s469, 2
          %s471 = scalar_lea.vmem %s2, %s470
        $region89: #{up_forward.3} parent=84 // pred_fallthru
          _
        // Predicated region
        $region90: #{up_forward.3} parent=84 // pred_check
          %p472 = pneg %p113
        $region91: #{up_forward.3} parent=84 // pred_check_branch
          %474 = sbr.rel (%p472) target = $region93
        $region92: #{up_forward.3} parent=84 // pred_region
          %p475 = scmp.lt.s32.totalorder %s17, 3
          %s476 = scalar_select %p475, %s17, 3
          %s477 = smul.addr %s476, 4
          %s478 = scalar_lea.vmem %s3, %s477
        $region93: #{up_forward.3} parent=84 // pred_fallthru
          _
        // Predicated region
        $region94: #{up_forward.3} parent=84 // pred_check
          %p479 = pneg %p139
        $region95: #{up_forward.3} parent=84 // pred_check_branch
          %481 = sbr.rel (%p479) target = $region97
        $region96: #{up_forward.3} parent=84 // pred_region
          %p482 = scmp.lt.s32.totalorder %s17, 3
          %s483 = scalar_select %p482, %s17, 3
          %s484 = smul.addr %s483, 4
          %s485 = scalar_lea.vmem %s4, %s484
        $region97: #{up_forward.3} parent=84 // pred_fallthru
          _
      $region85: #{up_forward.3} parent=5 // pred_fallthru
        _
    $region6: #{up_forward.3} parent=1 // loop_footer
      %s15 = sadd.s32 1, %s11
    $region7: #{up_forward.3} parent=1 // loop_footer_branch
      %10 = sbr.rel target = $region3
    $region8: #{up_forward.3} parent=1 // loop_exit
      _

// kernel: tile.13
$region0: #{tile.13}
  #allocation0 [shape = 's32[1]{0}', space=sflag, size = 0x4, scoped, tag = 'scoped memory for tile.13']
  %s0 = inlined_call_operand.vmem [shape: f32[4], index: 0, kind: input, shape index: {}]
  %s1 = inlined_call_operand.vmem [shape: f32[9,4], index: 1, kind: output, shape index: {}]
  // Predicated region
  $region2: #{tile.13} parent=0 // pred_check
    _
  $region3: #{tile.13} parent=0 // pred_check_branch
    %3 = sbr.rel (0) target = $region5
  $region4: #{tile.13} parent=0 // pred_region
    _
  $region5: #{tile.13} parent=0 // pred_fallthru
    _
  %v4 = vld [vmem:[%s0] ss:$0 sm:$0xff]
  %5 = vst [vmem:[%s1] sm:$0xff] %v4
  %s6 = scalar_lea.vmem %s1, 8
  %7 = vst [vmem:[%s6] sm:$0xff] %v4

// kernel: tile.14
$region0: #{tile.14}
  %s0 = inlined_call_operand.vmem [shape: f32[9,4], index: 0, kind: input, shape index: {}]
  %s1 = inlined_call_operand.vmem [shape: f32[36], index: 1, kind: output, shape index: {}]
  $region1: #{tile.14} parent=0
    #allocation0 [shape = 'u8[4096]{0}', space=vmem, size = 0x1000, scoped, tag = 'scoped mem for output reshape']
    %v2 = vld [vmem:[%s0] sm:$0x1]
    %vm3 = vcmask 31744
    %4 = vst.msk [vmem:[#allocation0] sm:$0x1] %vm3, %v2
    %s5 = scalar_lea.vmem %s0, 8
    %v6 = vld [vmem:[%s5] sm:$0x1]
    %7 = vrot.lane.b32.xlu0 %v6, 32
    %v8 = vpop.permute.xlu0 %7
    %vm9 = vcmask 294144
    %10 = vst.msk [vmem:[#allocation0] sm:$0x1] %vm9, %v8
    %s11 = scalar_lea.vmem %s0, 7
    %v12 = vld [vmem:[%s11] sm:$0x1]
    %13 = vrot.lane.b32.xlu0 %v12, 28
    %v14 = vpop.permute.xlu0 %13
    %vm15 = vcmask 261344
    %16 = vst.msk [vmem:[#allocation0] sm:$0x1] %vm15, %v14
    %s17 = scalar_lea.vmem %s0, 6
    %v18 = vld [vmem:[%s17] sm:$0x1]
    %19 = vrot.lane.b32.xlu0 %v18, 24
    %v20 = vpop.permute.xlu0 %19
    %vm21 = vcmask 228544
    %22 = vst.msk [vmem:[#allocation0] sm:$0x1] %vm21, %v20
    %s23 = scalar_lea.vmem %s0, 5
    %v24 = vld [vmem:[%s23] sm:$0x1]
    %25 = vrot.lane.b32.xlu0 %v24, 20
    %v26 = vpop.permute.xlu0 %25
    %vm27 = vcmask 195744
    %28 = vst.msk [vmem:[#allocation0] sm:$0x1] %vm27, %v26
    %s29 = scalar_lea.vmem %s0, 4
    %v30 = vld [vmem:[%s29] sm:$0x1]
    %31 = vrot.lane.b32.xlu0 %v30, 16
    %v32 = vpop.permute.xlu0 %31
    %vm33 = vcmask 162944
    %34 = vst.msk [vmem:[#allocation0] sm:$0x1] %vm33, %v32
    %s35 = scalar_lea.vmem %s0, 3
    %v36 = vld [vmem:[%s35] sm:$0x1]
    %37 = vrot.lane.b32.xlu0 %v36, 12
    %v38 = vpop.permute.xlu0 %37
    %vm39 = vcmask 130144
    %40 = vst.msk [vmem:[#allocation0] sm:$0x1] %vm39, %v38
    %s41 = scalar_lea.vmem %s0, 2
    %v42 = vld [vmem:[%s41] sm:$0x1]
    %43 = vrot.lane.b32.xlu0 %v42, 8
    %v44 = vpop.permute.xlu0 %43
    %vm45 = vcmask 97344
    %46 = vst.msk [vmem:[#allocation0] sm:$0x1] %vm45, %v44
    %s47 = scalar_lea.vmem %s0, 1
    %v48 = vld [vmem:[%s47] sm:$0x1]
    %49 = vrot.lane.b32.xlu0 %v48, 4
    %v50 = vpop.permute.xlu0 %49
    %vm51 = vcmask 64544
    %52 = vst.msk [vmem:[#allocation0] sm:$0x1] %vm51, %v50
    %s54 = sshll.u32 1, 1
    %s55 = ssub.s32 %s54, 1
    %v57 = vld [vmem:[#allocation0] sm:%s55]
    %s58 = sshll.u32 1, 1
    %s59 = ssub.s32 %s58, 1
    %60 = vst [vmem:[%s1] sm:%s59] %v57

// kernel: up_forward.5
$region0: #{up_forward.5}
  #allocation0 [shape = 'u32[]', space=smem, size = 0x4, offset = 0x4, fixed_abs, tag = 'smem constant byte address 0x4 - core index']
  #allocation1 [shape = 'u32[144,128]{1,0:T(1,128)}', space=vmem, size = 0x12000, scoped, tag = 'internal scratch']
  %s0 = inlined_call_operand.vmem [shape: bf16[4,512], index: 0, kind: input, shape index: {}]
  %s1 = inlined_call_operand.vmem [shape: f32[4,1], index: 1, kind: input, shape index: {}]
  %s2 = inlined_call_operand.vmem [shape: f32[4,1], index: 2, kind: input, shape index: {}]
  %s3 = inlined_call_operand.vmem [shape: f32[4,512], index: 3, kind: output, shape index: {}]
  %s4 = sld [smem:[#allocation0]]
  $region45: #{up_forward.5} parent=0
    _
  %s6 = ssub.s32 1, %s4
  %s7 = scalar_select 0, %s6, %s4
  loop: start=0, step=1, limit=4
  $region2: #{up_forward.5} parent=0 // loop_pre_header
    _
  $region3: #{up_forward.5} parent=0 // loop_header
    %s9 = sphi 0, %s13
    %p10 = scmp.ge.s32.totalorder %s9, 4
    %s19 = sphi 0, %s21
    %s22 = sphi 0, %s19
    %s23 = sphi 0, %s22
    %s39 = sphi 0, %s23
    %s43 = sphi 0, %s43
    %s45 = sphi 0, %s43
    %s46 = sphi 0, %s45
    %s60 = sphi 0, %s46
    %s64 = sphi 0, %s64
    %s66 = sphi 0, %s64
    %s67 = sphi 0, %s66
    %s81 = sphi 0, %s67
    %s87 = sphi 0, %s89
    %s90 = sphi 0, %s87
    %s91 = sphi 0, %s90
    %s107 = sphi 0, %s91
  $region4: #{up_forward.5} parent=0 // loop_header_branch
    %12 = sbr.rel (%p10) target = $region8
  $region5: #{up_forward.5} parent=0 // loop_body
    %s14 = ssub.s32 %s9, 1
    %s15 = ssub.s32 %s9, 2
    %s16 = sadd.s32 %s9, 1
    %s17 = ssub.s32 %s9, %s16
    %p18 = scmp.eq.s32.totalorder %s17, 0
    %s20 = sadd.s32 %s19, 1
    %s21 = scalar_select %p18, %s19, %s20
    %p24 = pneg %p18
    %p25 = scmp.eq.s32.totalorder %s9, 1
    %p26 = por %p24, %p25
    %p27 = scmp.ne.s32.totalorder %s19, %s22
    %p28 = scmp.eq.s32.totalorder %s9, 0
    %p29 = por %p27, %p28
    %p30 = scmp.ne.s32.totalorder %s19, %s22
    %p31 = scmp.eq.s32.totalorder %s14, 1
    %p32 = por %p30, %p31
    %p33 = scmp.ne.s32.totalorder %s22, %s23
    %p34 = scmp.eq.s32.totalorder %s14, 0
    %p35 = por %p33, %p34
    %p36 = scmp.ne.s32.totalorder %s22, %s23
    %p37 = scmp.eq.s32.totalorder %s15, 1
    %p38 = por %p36, %p37
    %p40 = scmp.ne.s32.totalorder %s23, %s39
    %p41 = scmp.eq.s32.totalorder %s15, 0
    %p42 = por %p40, %p41
    %s44 = sadd.s32 %s43, 1
    %p47 = scmp.eq.s32.totalorder %s9, 1
    %p48 = scmp.ne.s32.totalorder %s43, %s45
    %p49 = scmp.eq.s32.totalorder %s9, 0
    %p50 = por %p48, %p49
    %p51 = scmp.ne.s32.totalorder %s43, %s45
    %p52 = scmp.eq.s32.totalorder %s14, 1
    %p53 = por %p51, %p52
    %p54 = scmp.ne.s32.totalorder %s45, %s46
    %p55 = scmp.eq.s32.totalorder %s14, 0
    %p56 = por %p54, %p55
    %p57 = scmp.ne.s32.totalorder %s45, %s46
    %p58 = scmp.eq.s32.totalorder %s15, 1
    %p59 = por %p57, %p58
    %p61 = scmp.ne.s32.totalorder %s46, %s60
    %p62 = scmp.eq.s32.totalorder %s15, 0
    %p63 = por %p61, %p62
    %s65 = sadd.s32 %s64, 1
    %p68 = scmp.eq.s32.totalorder %s9, 1
    %p69 = scmp.ne.s32.totalorder %s64, %s66
    %p70 = scmp.eq.s32.totalorder %s9, 0
    %p71 = por %p69, %p70
    %p72 = scmp.ne.s32.totalorder %s64, %s66
    %p73 = scmp.eq.s32.totalorder %s14, 1
    %p74 = por %p72, %p73
    %p75 = scmp.ne.s32.totalorder %s66, %s67
    %p76 = scmp.eq.s32.totalorder %s14, 0
    %p77 = por %p75, %p76
    %p78 = scmp.ne.s32.totalorder %s66, %s67
    %p79 = scmp.eq.s32.totalorder %s15, 1
    %p80 = por %p78, %p79
    %p82 = scmp.ne.s32.totalorder %s67, %s81
    %p83 = scmp.eq.s32.totalorder %s15, 0
    %p84 = por %p82, %p83
    %s85 = ssub.s32 %s9, %s16
    %p86 = scmp.eq.s32.totalorder %s85, 0
    %s88 = sadd.s32 %s87, 1
    %s89 = scalar_select %p86, %s87, %s88
    %p92 = pneg %p86
    %p93 = scmp.eq.s32.totalorder %s9, 1
    %p94 = por %p92, %p93
    %p95 = scmp.ne.s32.totalorder %s87, %s90
    %p96 = scmp.eq.s32.totalorder %s9, 0
    %p97 = por %p95, %p96
    %p98 = scmp.ne.s32.totalorder %s87, %s90
    %p99 = scmp.eq.s32.totalorder %s14, 1
    %p100 = por %p98, %p99
    %p101 = scmp.ne.s32.totalorder %s90, %s91
    %p102 = scmp.eq.s32.totalorder %s14, 0
    %p103 = por %p101, %p102
    %p104 = scmp.ne.s32.totalorder %s90, %s91
    %p105 = scmp.eq.s32.totalorder %s15, 1
    %p106 = por %p104, %p105
    %p108 = scmp.ne.s32.totalorder %s91, %s107
    %p109 = scmp.eq.s32.totalorder %s15, 0
    %p110 = por %p108, %p109
    %p111 = scmp.le.s32.totalorder 1, %s9
    %p112 = scmp.lt.s32.totalorder %s9, 3
    %p113 = pnand %p111, %p112
    %p114 = pneg %p113
    // Predicated region
    $region9: #{up_forward.5} parent=5 // pred_check
      _
    $region10: #{up_forward.5} parent=5 // pred_check_branch
      %116 = sbr.rel (%p113) target = $region12
    $region11: #{up_forward.5} parent=5 // pred_region
      %s117 = ssub.s32 %s9, 1
      // Predicated region
      $region13: #{up_forward.5} parent=11 // pred_check
        %p118 = pneg %p56
      $region14: #{up_forward.5} parent=11 // pred_check_branch
        %120 = sbr.rel (%p118) target = $region16
      $region15: #{up_forward.5} parent=11 // pred_region
        _
      $region16: #{up_forward.5} parent=11 // pred_fallthru
        _
      // Predicated region
      $region17: #{up_forward.5} parent=11 // pred_check
        %p121 = pneg %p77
      $region18: #{up_forward.5} parent=11 // pred_check_branch
        %123 = sbr.rel (%p121) target = $region20
      $region19: #{up_forward.5} parent=11 // pred_region
        _
      $region20: #{up_forward.5} parent=11 // pred_fallthru
        _
    $region12: #{up_forward.5} parent=5 // pred_fallthru
      _
    %p124 = scmp.lt.s32.totalorder %s9, 2
    // Predicated region
    $region21: #{up_forward.5} parent=5 // pred_check
      %p125 = pneg %p124
    $region22: #{up_forward.5} parent=5 // pred_check_branch
      %127 = sbr.rel (%p125) target = $region24
    $region23: #{up_forward.5} parent=5 // pred_region
      // Predicated region
      $region25: #{up_forward.5} parent=23 // pred_check
        %p128 = pneg %p29
      $region26: #{up_forward.5} parent=23 // pred_check_branch
        %130 = sbr.rel (%p128) target = $region28
      $region27: #{up_forward.5} parent=23 // pred_region
        %s131 = smul.u32 2, %s9
        %p132 = scmp.lt.s32.totalorder %s131, 3
        %s133 = scalar_select %p132, %s131, 3
        %s134 = smul.addr %s133, 2
        %s135 = scalar_lea.vmem %s0, %s134
        %s136 = smul.u32 2, %s9
      $region28: #{up_forward.5} parent=23 // pred_fallthru
        _
    $region24: #{up_forward.5} parent=5 // pred_fallthru
      _
    %p137 = scmp.le.s32.totalorder 1, %s9
    %p138 = scmp.lt.s32.totalorder %s9, 3
    %p139 = pnand %p137, %p138
    %p140 = pneg %p139
    // Predicated region
    $region29: #{up_forward.5} parent=5 // pred_check
      _
    $region30: #{up_forward.5} parent=5 // pred_check_branch
      %142 = sbr.rel (%p139) target = $region32
    $region31: #{up_forward.5} parent=5 // pred_region
      %s143 = ssub.s32 %s9, 1
      %s144 = smul.u32 2, %s14
      %p145 = scmp.lt.s32.totalorder %s144, 3
      %s146 = scalar_select %p145, %s144, 3
      %s147 = smul.addr %s146, 2
      %s148 = scalar_lea.vmem %s0, %s147
      %p149 = pneg %p35
      %p150 = pneg %p32
      %p151 = pneg %p56
      %p152 = pneg %p53
      %p153 = pneg %p77
      %p154 = pneg %p74
      %p155 = pneg %p103
      %p156 = pneg %p100
      %s157 = smul.u32 2, %s14
      %p158 = scmp.lt.s32.totalorder %s157, 3
      %s159 = scalar_select %p158, %s157, 3
      %s160 = smul.addr %s159, 4
      %s161 = scalar_lea.vmem %s3, %s160
      %s162 = smul.u32 2, %s14
      %p163 = scmp.lt.s32.totalorder %s162, 3
      %s164 = scalar_select %p163, %s162, 3
      %s165 = smul.addr %s164, 2
      %s166 = scalar_lea.vmem %s0, %s165
      %s167 = smul.u32 2, %s14
      %s168 = smul.u32 2, %s14
      %p169 = scmp.lt.s32.totalorder %s168, 3
      %s170 = scalar_select %p169, %s168, 3
      %s171 = smul.addr %s170, 4
      %s172 = scalar_lea.vmem %s3, %s171
      %s173 = smul.u32 2, %s14
      %v174 = vld [vmem:[%s166] sm:$0xf]
      %v175 = vunpack.c.l.bf16 %v174
      %v176 = vld [vmem:[%s1] sm:$0xf]
      %178 = vset.pattern.permute.xlu0 0
      %179 = vperm.xlu0 %178, %v176
      %v180 = vpop.permute.xlu0 %179
      %v182 = vunpack.c.l.s4 839922192
      %v183 = vunpack.c.0.s8 %v182
      %v184 = vlaneseq
      %v185 = vshrl.u32 %v184, 7
      %v186 = vsub.s32 %v183, %v185
      %v187 = vrot.slane %v180, %v186
      %v189 = vmul.f32 %v175, %v187
      %v190 = vld [vmem:[%s2] sm:$0xf]
      %192 = vset.pattern.permute.xlu0 0
      %193 = vperm.xlu0 %192, %v190
      %v194 = vpop.permute.xlu0 %193
      %v196 = vunpack.c.l.s4 839922192
      %v197 = vunpack.c.0.s8 %v196
      %v198 = vlaneseq
      %v199 = vshrl.u32 %v198, 7
      %v200 = vsub.s32 %v197, %v199
      %v201 = vrot.slane %v194, %v200
      %v203 = vadd.f32 %v189, %v201
      %vm204 = vcmp.gt.f32.partialorder %v203, 0.0
      %v205 = vmul.f32 %v203, 0.01
      %v206 = vsel %vm204, %v203, %v205
      %207 = vst [vmem:[%s172] sm:$0xff] %v206
      %s208 = smul.u32 2, %s14
      %p209 = scmp.lt.s32.totalorder %s208, 3
      %s210 = scalar_select %p209, %s208, 3
      %s211 = smul.addr %s210, 4
      %s212 = scalar_lea.vmem %s3, %s211
      // Predicated region
      $region33: #{up_forward.5} parent=31 // pred_check
        %p213 = pneg %p100
      $region34: #{up_forward.5} parent=31 // pred_check_branch
        %215 = sbr.rel (%p213) target = $region36
      $region35: #{up_forward.5} parent=31 // pred_region
        %s216 = smul.u32 2, %s14
      $region36: #{up_forward.5} parent=31 // pred_fallthru
        _
    $region32: #{up_forward.5} parent=5 // pred_fallthru
      _
    %p217 = scmp.le.s32.totalorder 2, %s9
    // Predicated region
    $region37: #{up_forward.5} parent=5 // pred_check
      %p218 = pneg %p217
    $region38: #{up_forward.5} parent=5 // pred_check_branch
      %220 = sbr.rel (%p218) target = $region40
    $region39: #{up_forward.5} parent=5 // pred_region
      %s221 = ssub.s32 %s9, 2
      // Predicated region
      $region41: #{up_forward.5} parent=39 // pred_check
        %p222 = pneg %p106
      $region42: #{up_forward.5} parent=39 // pred_check_branch
        %224 = sbr.rel (%p222) target = $region44
      $region43: #{up_forward.5} parent=39 // pred_region
        %s225 = smul.u32 2, %s15
        %p226 = scmp.lt.s32.totalorder %s225, 3
        %s227 = scalar_select %p226, %s225, 3
        %s228 = smul.addr %s227, 4
        %s229 = scalar_lea.vmem %s3, %s228
      $region44: #{up_forward.5} parent=39 // pred_fallthru
        _
    $region40: #{up_forward.5} parent=5 // pred_fallthru
      _
  $region6: #{up_forward.5} parent=0 // loop_footer
    %s13 = sadd.s32 1, %s9
  $region7: #{up_forward.5} parent=0 // loop_footer_branch
    %8 = sbr.rel target = $region3
  $region8: #{up_forward.5} parent=0 // loop_exit
    _

// kernel: up_forward.4
$region0: #{up_forward.4}
  #allocation0 [shape = 'u32[]', space=smem, size = 0x4, offset = 0x4, fixed_abs, tag = 'smem constant byte address 0x4 - core index']
  #allocation1 [shape = 'u32[144,128]{1,0:T(1,128)}', space=vmem, size = 0x12000, scoped, tag = 'internal scratch']
  %s0 = inlined_call_operand.vmem [shape: bf16[128,512], index: 0, kind: input, shape index: {}]
  %s1 = inlined_call_operand.vmem [shape: bf16[4,128], index: 1, kind: input, shape index: {}]
  %s2 = inlined_call_operand.vmem [shape: f32[128,1], index: 2, kind: input, shape index: {}]
  %s3 = inlined_call_operand.vmem [shape: f32[128,1], index: 3, kind: input, shape index: {}]
  %s4 = inlined_call_operand.vmem [shape: bf16[4,512], index: 4, kind: output, shape index: {0}]
  %s5 = inlined_call_operand.vmem [shape: f32[4,4,1], index: 5, kind: output, shape index: {1}]
  %s6 = inlined_call_operand.vmem [shape: f32[4,4,1], index: 6, kind: output, shape index: {2}]
  %7 = xla_tuple %s4, %s5, %s6
  %s8 = sld [smem:[#allocation0]]
  $region106: #{up_forward.4} parent=0
    _
  %s10 = ssub.s32 1, %s8
  %s11 = scalar_select 0, %s10, %s8
  $region1: #{up_forward.4} parent=0
    #allocation2 [shape = 'u8[65536]{0}', space=vmem, size = 0x10000, scoped, tag = 'input window, operand 0']
    loop: start=0, step=1, limit=6
    $region2: #{up_forward.4} parent=1 // loop_pre_header
      _
    $region3: #{up_forward.4} parent=1 // loop_header
      %s13 = sphi 0, %s17
      %p14 = scmp.ge.s32.totalorder %s13, 6
      %s23 = sphi 0, %s25
      %s26 = sphi 0, %s23
      %s27 = sphi 0, %s26
      %s43 = sphi 0, %s27
      %s47 = sphi 0, %s47
      %s49 = sphi 0, %s47
      %s50 = sphi 0, %s49
      %s64 = sphi 0, %s50
      %s68 = sphi 0, %s68
      %s70 = sphi 0, %s68
      %s71 = sphi 0, %s70
      %s85 = sphi 0, %s71
      %s89 = sphi 0, %s89
      %s91 = sphi 0, %s89
      %s92 = sphi 0, %s91
      %s106 = sphi 0, %s92
      %s112 = sphi 0, %s114
      %s115 = sphi 0, %s112
      %s116 = sphi 0, %s115
      %s132 = sphi 0, %s116
      %s138 = sphi 0, %s140
      %s141 = sphi 0, %s138
      %s142 = sphi 0, %s141
      %s158 = sphi 0, %s142
      %s164 = sphi 0, %s166
      %s167 = sphi 0, %s164
      %s168 = sphi 0, %s167
      %s184 = sphi 0, %s168
    $region4: #{up_forward.4} parent=1 // loop_header_branch
      %16 = sbr.rel (%p14) target = $region8
    $region5: #{up_forward.4} parent=1 // loop_body
      %s18 = ssub.s32 %s13, 1
      %s19 = ssub.s32 %s13, 2
      %s20 = sadd.s32 %s13, 1
      %s21 = ssub.s32 %s13, %s20
      %p22 = scmp.eq.s32.totalorder %s21, 0
      %s24 = sadd.s32 %s23, 1
      %s25 = scalar_select %p22, %s23, %s24
      %p28 = pneg %p22
      %p29 = scmp.eq.s32.totalorder %s13, 3
      %p30 = por %p28, %p29
      %p31 = scmp.ne.s32.totalorder %s23, %s26
      %p32 = scmp.eq.s32.totalorder %s13, 0
      %p33 = por %p31, %p32
      %p34 = scmp.ne.s32.totalorder %s23, %s26
      %p35 = scmp.eq.s32.totalorder %s18, 3
      %p36 = por %p34, %p35
      %p37 = scmp.ne.s32.totalorder %s26, %s27
      %p38 = scmp.eq.s32.totalorder %s18, 0
      %p39 = por %p37, %p38
      %p40 = scmp.ne.s32.totalorder %s26, %s27
      %p41 = scmp.eq.s32.totalorder %s19, 3
      %p42 = por %p40, %p41
      %p44 = scmp.ne.s32.totalorder %s27, %s43
      %p45 = scmp.eq.s32.totalorder %s19, 0
      %p46 = por %p44, %p45
      %s48 = sadd.s32 %s47, 1
      %p51 = scmp.eq.s32.totalorder %s13, 3
      %p52 = scmp.ne.s32.totalorder %s47, %s49
      %p53 = scmp.eq.s32.totalorder %s13, 0
      %p54 = por %p52, %p53
      %p55 = scmp.ne.s32.totalorder %s47, %s49
      %p56 = scmp.eq.s32.totalorder %s18, 3
      %p57 = por %p55, %p56
      %p58 = scmp.ne.s32.totalorder %s49, %s50
      %p59 = scmp.eq.s32.totalorder %s18, 0
      %p60 = por %p58, %p59
      %p61 = scmp.ne.s32.totalorder %s49, %s50
      %p62 = scmp.eq.s32.totalorder %s19, 3
      %p63 = por %p61, %p62
      %p65 = scmp.ne.s32.totalorder %s50, %s64
      %p66 = scmp.eq.s32.totalorder %s19, 0
      %p67 = por %p65, %p66
      %s69 = sadd.s32 %s68, 1
      %p72 = scmp.eq.s32.totalorder %s13, 3
      %p73 = scmp.ne.s32.totalorder %s68, %s70
      %p74 = scmp.eq.s32.totalorder %s13, 0
      %p75 = por %p73, %p74
      %p76 = scmp.ne.s32.totalorder %s68, %s70
      %p77 = scmp.eq.s32.totalorder %s18, 3
      %p78 = por %p76, %p77
      %p79 = scmp.ne.s32.totalorder %s70, %s71
      %p80 = scmp.eq.s32.totalorder %s18, 0
      %p81 = por %p79, %p80
      %p82 = scmp.ne.s32.totalorder %s70, %s71
      %p83 = scmp.eq.s32.totalorder %s19, 3
      %p84 = por %p82, %p83
      %p86 = scmp.ne.s32.totalorder %s71, %s85
      %p87 = scmp.eq.s32.totalorder %s19, 0
      %p88 = por %p86, %p87
      %s90 = sadd.s32 %s89, 1
      %p93 = scmp.eq.s32.totalorder %s13, 3
      %p94 = scmp.ne.s32.totalorder %s89, %s91
      %p95 = scmp.eq.s32.totalorder %s13, 0
      %p96 = por %p94, %p95
      %p97 = scmp.ne.s32.totalorder %s89, %s91
      %p98 = scmp.eq.s32.totalorder %s18, 3
      %p99 = por %p97, %p98
      %p100 = scmp.ne.s32.totalorder %s91, %s92
      %p101 = scmp.eq.s32.totalorder %s18, 0
      %p102 = por %p100, %p101
      %p103 = scmp.ne.s32.totalorder %s91, %s92
      %p104 = scmp.eq.s32.totalorder %s19, 3
      %p105 = por %p103, %p104
      %p107 = scmp.ne.s32.totalorder %s92, %s106
      %p108 = scmp.eq.s32.totalorder %s19, 0
      %p109 = por %p107, %p108
      %s110 = ssub.s32 %s13, %s20
      %p111 = scmp.eq.s32.totalorder %s110, 0
      %s113 = sadd.s32 %s112, 1
      %s114 = scalar_select %p111, %s112, %s113
      %p117 = pneg %p111
      %p118 = scmp.eq.s32.totalorder %s13, 3
      %p119 = por %p117, %p118
      %p120 = scmp.ne.s32.totalorder %s112, %s115
      %p121 = scmp.eq.s32.totalorder %s13, 0
      %p122 = por %p120, %p121
      %p123 = scmp.ne.s32.totalorder %s112, %s115
      %p124 = scmp.eq.s32.totalorder %s18, 3
      %p125 = por %p123, %p124
      %p126 = scmp.ne.s32.totalorder %s115, %s116
      %p127 = scmp.eq.s32.totalorder %s18, 0
      %p128 = por %p126, %p127
      %p129 = scmp.ne.s32.totalorder %s115, %s116
      %p130 = scmp.eq.s32.totalorder %s19, 3
      %p131 = por %p129, %p130
      %p133 = scmp.ne.s32.totalorder %s116, %s132
      %p134 = scmp.eq.s32.totalorder %s19, 0
      %p135 = por %p133, %p134
      %s136 = ssub.s32 %s13, %s20
      %p137 = scmp.eq.s32.totalorder %s136, 0
      %s139 = sadd.s32 %s138, 1
      %s140 = scalar_select %p137, %s138, %s139
      %p143 = pneg %p137
      %p144 = scmp.eq.s32.totalorder %s13, 3
      %p145 = por %p143, %p144
      %p146 = scmp.ne.s32.totalorder %s138, %s141
      %p147 = scmp.eq.s32.totalorder %s13, 0
      %p148 = por %p146, %p147
      %p149 = scmp.ne.s32.totalorder %s138, %s141
      %p150 = scmp.eq.s32.totalorder %s18, 3
      %p151 = por %p149, %p150
      %p152 = scmp.ne.s32.totalorder %s141, %s142
      %p153 = scmp.eq.s32.totalorder %s18, 0
      %p154 = por %p152, %p153
      %p155 = scmp.ne.s32.totalorder %s141, %s142
      %p156 = scmp.eq.s32.totalorder %s19, 3
      %p157 = por %p155, %p156
      %p159 = scmp.ne.s32.totalorder %s142, %s158
      %p160 = scmp.eq.s32.totalorder %s19, 0
      %p161 = por %p159, %p160
      %s162 = ssub.s32 %s13, %s20
      %p163 = scmp.eq.s32.totalorder %s162, 0
      %s165 = sadd.s32 %s164, 1
      %s166 = scalar_select %p163, %s164, %s165
      %p169 = pneg %p163
      %p170 = scmp.eq.s32.totalorder %s13, 3
      %p171 = por %p169, %p170
      %p172 = scmp.ne.s32.totalorder %s164, %s167
      %p173 = scmp.eq.s32.totalorder %s13, 0
      %p174 = por %p172, %p173
      %p175 = scmp.ne.s32.totalorder %s164, %s167
      %p176 = scmp.eq.s32.totalorder %s18, 3
      %p177 = por %p175, %p176
      %p178 = scmp.ne.s32.totalorder %s167, %s168
      %p179 = scmp.eq.s32.totalorder %s18, 0
      %p180 = por %p178, %p179
      %p181 = scmp.ne.s32.totalorder %s167, %s168
      %p182 = scmp.eq.s32.totalorder %s19, 3
      %p183 = por %p181, %p182
      %p185 = scmp.ne.s32.totalorder %s168, %s184
      %p186 = scmp.eq.s32.totalorder %s19, 0
      %p187 = por %p185, %p186
      %p188 = scmp.le.s32.totalorder 1, %s13
      %p189 = scmp.lt.s32.totalorder %s13, 5
      %p190 = pnand %p188, %p189
      %p191 = pneg %p190
      // Predicated region
      $region9: #{up_forward.4} parent=5 // pred_check
        _
      $region10: #{up_forward.4} parent=5 // pred_check_branch
        %193 = sbr.rel (%p190) target = $region12
      $region11: #{up_forward.4} parent=5 // pred_region
        %s194 = ssub.s32 %s13, 1
        // Predicated region
        $region13: #{up_forward.4} parent=11 // pred_check
          %p195 = pneg %p60
        $region14: #{up_forward.4} parent=11 // pred_check_branch
          %197 = sbr.rel (%p195) target = $region16
        $region15: #{up_forward.4} parent=11 // pred_region
          _
        $region16: #{up_forward.4} parent=11 // pred_fallthru
          _
        // Predicated region
        $region17: #{up_forward.4} parent=11 // pred_check
          %p198 = pneg %p81
        $region18: #{up_forward.4} parent=11 // pred_check_branch
          %200 = sbr.rel (%p198) target = $region20
        $region19: #{up_forward.4} parent=11 // pred_region
          _
        $region20: #{up_forward.4} parent=11 // pred_fallthru
          _
        // Predicated region
        $region21: #{up_forward.4} parent=11 // pred_check
          %p201 = pneg %p102
        $region22: #{up_forward.4} parent=11 // pred_check_branch
          %203 = sbr.rel (%p201) target = $region24
        $region23: #{up_forward.4} parent=11 // pred_region
          _
        $region24: #{up_forward.4} parent=11 // pred_fallthru
          _
      $region12: #{up_forward.4} parent=5 // pred_fallthru
        _
      %p204 = scmp.lt.s32.totalorder %s13, 4
      // Predicated region
      $region25: #{up_forward.4} parent=5 // pred_check
        %p205 = pneg %p204
      $region26: #{up_forward.4} parent=5 // pred_check_branch
        %207 = sbr.rel (%p205) target = $region28
      $region27: #{up_forward.4} parent=5 // pred_region
        // Predicated region
        $region29: #{up_forward.4} parent=27 // pred_check
          %p208 = pneg %p33
        $region30: #{up_forward.4} parent=27 // pred_check_branch
          %210 = sbr.rel (%p208) target = $region32
        $region31: #{up_forward.4} parent=27 // pred_region
          %s211 = sand.u32 %s23, 1
          %s212 = sand.u32 %s23, 1
          %s213 = smul.addr %s212, 64
          %s214 = scalar_lea.vmem [#allocation2], %s213
          %s215 = smul.addr %s13, 4
          %s216 = scalar_lea.vmem %s0, %s215
          // Predicated region
          $region33: #{up_forward.4} parent=31 // pred_check
            _
          $region34: #{up_forward.4} parent=31 // pred_check_branch
            %218 = sbr.rel (0) target = $region36
          $region35: #{up_forward.4} parent=31 // pred_region
            // Predicated region
            $region37: #{up_forward.4} parent=35 // pred_check
              _
            $region38: #{up_forward.4} parent=35 // pred_check_branch
              %220 = sbr.rel target = $region40
            $region39: #{up_forward.4} parent=35 // pred_region
              // Predicated region
              $region52: #{up_forward.4} parent=39 // pred_check
                _
              $region53: #{up_forward.4} parent=39 // pred_check_branch
                %266 = sbr.rel (0) target = $region55
              $region54: #{up_forward.4} parent=39 // pred_region
                loop: start=0, step=1, limit=1
                $region56: #{up_forward.4} parent=54 // loop_pre_header
                  _
                $region57: #{up_forward.4} parent=54 // loop_header
                  %s268 = sphi 0, %s272
                  %p269 = scmp.ge.s32.totalorder %s268, 1
                  %s273 = sphi %s216, %s216
                  %s274 = sphi %s214, %s214
                $region58: #{up_forward.4} parent=54 // loop_header_branch
                  %271 = sbr.rel (%p269) target = $region62
                $region59: #{up_forward.4} parent=54 // loop_body
                  _
                $region60: #{up_forward.4} parent=54 // loop_footer
                  %s272 = sadd.s32 1, %s268
                $region61: #{up_forward.4} parent=54 // loop_footer_branch
                  %267 = sbr.rel target = $region57
                $region62: #{up_forward.4} parent=54 // loop_exit
                  _
                %s276 = ssub.s32 16, 1
                loop: start=0, step=1, limit=1
                $region63: #{up_forward.4} parent=54 // loop_pre_header
                  _
                $region64: #{up_forward.4} parent=54 // loop_header
                  %s278 = sphi 0, %s282
                  %p279 = scmp.ge.s32.totalorder %s278, 1
                  %s283 = sphi %s216, %s216
                  %s284 = sphi %s214, %s214
                $region65: #{up_forward.4} parent=54 // loop_header_branch
                  %281 = sbr.rel (%p279) target = $region69
                $region66: #{up_forward.4} parent=54 // loop_body
                  %v285 = vld [vmem:[%s283] sm:%s276]
                  %286 = vst [vmem:[%s284] sm:%s276] %v285
                  %v287 = vld [vmem:[%s283 + $0x10] sm:%s276]
                  %288 = vst [vmem:[%s284 + $0x4] sm:%s276] %v287
                  %v289 = vld [vmem:[%s283 + $0x20] sm:%s276]
                  %290 = vst [vmem:[%s284 + $0x8] sm:%s276] %v289
                  %v291 = vld [vmem:[%s283 + $0x30] sm:%s276]
                  %292 = vst [vmem:[%s284 + $0xc] sm:%s276] %v291
                  %v293 = vld [vmem:[%s283 + $0x40] sm:%s276]
                  %294 = vst [vmem:[%s284 + $0x10] sm:%s276] %v293
                  %v295 = vld [vmem:[%s283 + $0x50] sm:%s276]
                  %296 = vst [vmem:[%s284 + $0x14] sm:%s276] %v295
                  %v297 = vld [vmem:[%s283 + $0x60] sm:%s276]
                  %298 = vst [vmem:[%s284 + $0x18] sm:%s276] %v297
                  %v299 = vld [vmem:[%s283 + $0x70] sm:%s276]
                  %300 = vst [vmem:[%s284 + $0x1c] sm:%s276] %v299
                  %v301 = vld [vmem:[%s283 + $0x80] sm:%s276]
                  %302 = vst [vmem:[%s284 + $0x20] sm:%s276] %v301
                  %v303 = vld [vmem:[%s283 + $0x90] sm:%s276]
                  %304 = vst [vmem:[%s284 + $0x24] sm:%s276] %v303
                  %v305 = vld [vmem:[%s283 + $0xa0] sm:%s276]
                  %306 = vst [vmem:[%s284 + $0x28] sm:%s276] %v305
                  %v307 = vld [vmem:[%s283 + $0xb0] sm:%s276]
                  %308 = vst [vmem:[%s284 + $0x2c] sm:%s276] %v307
                  %v309 = vld [vmem:[%s283 + $0xc0] sm:%s276]
                  %310 = vst [vmem:[%s284 + $0x30] sm:%s276] %v309
                  %v311 = vld [vmem:[%s283 + $0xd0] sm:%s276]
                  %312 = vst [vmem:[%s284 + $0x34] sm:%s276] %v311
                  %v313 = vld [vmem:[%s283 + $0xe0] sm:%s276]
                  %314 = vst [vmem:[%s284 + $0x38] sm:%s276] %v313
                  %v315 = vld [vmem:[%s283 + $0xf0] sm:%s276]
                  %316 = vst [vmem:[%s284 + $0x3c] sm:%s276] %v315
                $region67: #{up_forward.4} parent=54 // loop_footer
                  %s282 = sadd.s32 1, %s278
                $region68: #{up_forward.4} parent=54 // loop_footer_branch
                  %277 = sbr.rel target = $region64
                $region69: #{up_forward.4} parent=54 // loop_exit
                  _
              $region55: #{up_forward.4} parent=39 // pred_fallthru
                _
            $region40: #{up_forward.4} parent=35 // pred_fallthru
              _
            // Predicated region
            $region41: #{up_forward.4} parent=35 // pred_check
              _
            $region42: #{up_forward.4} parent=35 // pred_check_branch
              %222 = sbr.rel (0) target = $region44
            $region43: #{up_forward.4} parent=35 // pred_region
              %s224 = ssub.s32 16, 1
              loop: start=0, step=1, limit=1
              $region45: #{up_forward.4} parent=43 // loop_pre_header
                _
              $region46: #{up_forward.4} parent=43 // loop_header
                %s226 = sphi 0, %s230
                %p227 = scmp.ge.s32.totalorder %s226, 1
                %s231 = sphi %s216, %s216
                %s232 = sphi %s214, %s214
              $region47: #{up_forward.4} parent=43 // loop_header_branch
                %229 = sbr.rel (%p227) target = $region51
              $region48: #{up_forward.4} parent=43 // loop_body
                %v233 = vld [vmem:[%s231] sm:%s224]
                %234 = vst [vmem:[%s232] sm:%s224] %v233
                %v235 = vld [vmem:[%s231 + $0x10] sm:%s224]
                %236 = vst [vmem:[%s232 + $0x4] sm:%s224] %v235
                %v237 = vld [vmem:[%s231 + $0x20] sm:%s224]
                %238 = vst [vmem:[%s232 + $0x8] sm:%s224] %v237
                %v239 = vld [vmem:[%s231 + $0x30] sm:%s224]
                %240 = vst [vmem:[%s232 + $0xc] sm:%s224] %v239
                %v241 = vld [vmem:[%s231 + $0x40] sm:%s224]
                %242 = vst [vmem:[%s232 + $0x10] sm:%s224] %v241
                %v243 = vld [vmem:[%s231 + $0x50] sm:%s224]
                %244 = vst [vmem:[%s232 + $0x14] sm:%s224] %v243
                %v245 = vld [vmem:[%s231 + $0x60] sm:%s224]
                %246 = vst [vmem:[%s232 + $0x18] sm:%s224] %v245
                %v247 = vld [vmem:[%s231 + $0x70] sm:%s224]
                %248 = vst [vmem:[%s232 + $0x1c] sm:%s224] %v247
                %v249 = vld [vmem:[%s231 + $0x80] sm:%s224]
                %250 = vst [vmem:[%s232 + $0x20] sm:%s224] %v249
                %v251 = vld [vmem:[%s231 + $0x90] sm:%s224]
                %252 = vst [vmem:[%s232 + $0x24] sm:%s224] %v251
                %v253 = vld [vmem:[%s231 + $0xa0] sm:%s224]
                %254 = vst [vmem:[%s232 + $0x28] sm:%s224] %v253
                %v255 = vld [vmem:[%s231 + $0xb0] sm:%s224]
                %256 = vst [vmem:[%s232 + $0x2c] sm:%s224] %v255
                %v257 = vld [vmem:[%s231 + $0xc0] sm:%s224]
                %258 = vst [vmem:[%s232 + $0x30] sm:%s224] %v257
                %v259 = vld [vmem:[%s231 + $0xd0] sm:%s224]
                %260 = vst [vmem:[%s232 + $0x34] sm:%s224] %v259
                %v261 = vld [vmem:[%s231 + $0xe0] sm:%s224]
                %262 = vst [vmem:[%s232 + $0x38] sm:%s224] %v261
                %v263 = vld [vmem:[%s231 + $0xf0] sm:%s224]
                %264 = vst [vmem:[%s232 + $0x3c] sm:%s224] %v263
              $region49: #{up_forward.4} parent=43 // loop_footer
                %s230 = sadd.s32 1, %s226
              $region50: #{up_forward.4} parent=43 // loop_footer_branch
                %225 = sbr.rel target = $region46
              $region51: #{up_forward.4} parent=43 // loop_exit
                _
            $region44: #{up_forward.4} parent=35 // pred_fallthru
              _
          $region36: #{up_forward.4} parent=31 // pred_fallthru
            _
          %317 = vnop
        $region32: #{up_forward.4} parent=27 // pred_fallthru
          _
      $region28: #{up_forward.4} parent=5 // pred_fallthru
        _
      %p318 = scmp.le.s32.totalorder 1, %s13
      %p319 = scmp.lt.s32.totalorder %s13, 5
      %p320 = pnand %p318, %p319
      %p321 = pneg %p320
      // Predicated region
      $region70: #{up_forward.4} parent=5 // pred_check
        _
      $region71: #{up_forward.4} parent=5 // pred_check_branch
        %323 = sbr.rel (%p320) target = $region73
      $region72: #{up_forward.4} parent=5 // pred_region
        %s324 = ssub.s32 %s13, 1
        %s325 = sand.u32 %s26, 1
        %s326 = sand.u32 %s26, 1
        %s327 = smul.addr %s326, 64
        %s328 = scalar_lea.vmem [#allocation2], %s327
        // Predicated region
        $region74: #{up_forward.4} parent=72 // pred_check
          %p329 = pneg %p39
        $region75: #{up_forward.4} parent=72 // pred_check_branch
          %331 = sbr.rel (%p329) target = $region77
        $region76: #{up_forward.4} parent=72 // pred_region
          _
        $region77: #{up_forward.4} parent=72 // pred_fallthru
          _
        %s332 = sand.u32 %s26, 1
        %s333 = sand.u32 %s26, 1
        %s334 = smul.addr %s333, 64
        %s335 = scalar_lea.vmem [#allocation2], %s334
        %p336 = pneg %p39
        %p337 = pneg %p36
        %p338 = pneg %p60
        %p339 = pneg %p57
        %p340 = pneg %p81
        %p341 = pneg %p78
        %p342 = pneg %p102
        %p343 = pneg %p99
        %p344 = pneg %p128
        %p345 = pneg %p125
        %p346 = scmp.lt.s32.totalorder %s18, 3
        %s347 = scalar_select %p346, %s18, 3
        %s348 = smul.addr %s347, 2
        %s349 = scalar_lea.vmem %s4, %s348
        %p350 = pneg %p154
        %p351 = pneg %p151
        %p352 = scmp.lt.s32.totalorder %s18, 3
        %s353 = scalar_select %p352, %s18, 3
        %s354 = smul.addr %s353, 4
        %s355 = scalar_lea.vmem %s5, %s354
        %p356 = pneg %p180
        %p357 = pneg %p177
        %p358 = scmp.lt.s32.totalorder %s18, 3
        %s359 = scalar_select %p358, %s18, 3
        %s360 = smul.addr %s359, 4
        %s361 = scalar_lea.vmem %s6, %s360
        %p362 = scmp.lt.s32.totalorder %s18, 3
        %s363 = scalar_select %p362, %s18, 3
        %s364 = smul.addr %s363, 2
        %s365 = scalar_lea.vmem %s4, %s364
        %p366 = scmp.lt.s32.totalorder %s18, 3
        %s367 = scalar_select %p366, %s18, 3
        %s368 = smul.addr %s367, 4
        %s369 = scalar_lea.vmem %s5, %s368
        %p370 = scmp.lt.s32.totalorder %s18, 3
        %s371 = scalar_select %p370, %s18, 3
        %s372 = smul.addr %s371, 4
        %s373 = scalar_lea.vmem %s6, %s372
        %v375 = vld [vmem:[%s328] sm:$0xf]
        %v376 = vld [vmem:[%s328 + $0x4] sm:$0xf]
        %v377 = vld [vmem:[%s328 + $0x8] sm:$0xf]
        %v378 = vld [vmem:[%s328 + $0xc] sm:$0xf]
        %v379 = vld [vmem:[%s328 + $0x10] sm:$0xf]
        %v380 = vld [vmem:[%s328 + $0x14] sm:$0xf]
        %v381 = vld [vmem:[%s328 + $0x18] sm:$0xf]
        %v382 = vld [vmem:[%s328 + $0x1c] sm:$0xf]
        %v383 = vld [vmem:[%s328 + $0x20] sm:$0xf]
        %v384 = vld [vmem:[%s328 + $0x24] sm:$0xf]
        %v385 = vld [vmem:[%s328 + $0x28] sm:$0xf]
        %v386 = vld [vmem:[%s328 + $0x2c] sm:$0xf]
        %v387 = vld [vmem:[%s328 + $0x30] sm:$0xf]
        %v388 = vld [vmem:[%s328 + $0x34] sm:$0xf]
        %v389 = vld [vmem:[%s328 + $0x38] sm:$0xf]
        %v390 = vld [vmem:[%s328 + $0x3c] sm:$0xf]
        %v391 = vunpack.c.l.bf16 %v375
        %v392 = vunpack.c.l.bf16 %v376
        %v393 = vunpack.c.l.bf16 %v377
        %v394 = vunpack.c.l.bf16 %v378
        %v395 = vunpack.c.l.bf16 %v379
        %v396 = vunpack.c.l.bf16 %v380
        %v397 = vunpack.c.l.bf16 %v381
        %v398 = vunpack.c.l.bf16 %v382
        %v399 = vunpack.c.l.bf16 %v383
        %v400 = vunpack.c.l.bf16 %v384
        %v401 = vunpack.c.l.bf16 %v385
        %v402 = vunpack.c.l.bf16 %v386
        %v403 = vunpack.c.l.bf16 %v387
        %v404 = vunpack.c.l.bf16 %v388
        %v405 = vunpack.c.l.bf16 %v389
        %v406 = vunpack.c.l.bf16 %v390
        %v407 = vld [vmem:[%s2] sm:$0xff]
        %v408 = vld [vmem:[%s2 + $0x8] sm:$0xff]
        %v409 = vld [vmem:[%s2 + $0x10] sm:$0xff]
        %v410 = vld [vmem:[%s2 + $0x18] sm:$0xff]
        %v411 = vld [vmem:[%s2 + $0x20] sm:$0xff]
        %v412 = vld [vmem:[%s2 + $0x28] sm:$0xff]
        %v413 = vld [vmem:[%s2 + $0x30] sm:$0xff]
        %v414 = vld [vmem:[%s2 + $0x38] sm:$0xff]
        %v415 = vld [vmem:[%s2 + $0x40] sm:$0xff]
        %v416 = vld [vmem:[%s2 + $0x48] sm:$0xff]
        %v417 = vld [vmem:[%s2 + $0x50] sm:$0xff]
        %v418 = vld [vmem:[%s2 + $0x58] sm:$0xff]
        %v419 = vld [vmem:[%s2 + $0x60] sm:$0xff]
        %v420 = vld [vmem:[%s2 + $0x68] sm:$0xff]
        %v421 = vld [vmem:[%s2 + $0x70] sm:$0xff]
        %v422 = vld [vmem:[%s2 + $0x78] sm:$0xff]
        %424 = vset.pattern.permute.xlu0 0
        %425 = vperm.xlu0 %424, %v407
        %v426 = vpop.permute.xlu0 %425
        %429 = vset.pattern.permute.xlu0 0
        %430 = vperm.xlu0 %429, %v408
        %v431 = vpop.permute.xlu0 %430
        %434 = vset.pattern.permute.xlu0 0
        %435 = vperm.xlu0 %434, %v409
        %v436 = vpop.permute.xlu0 %435
        %439 = vset.pattern.permute.xlu0 0
        %440 = vperm.xlu0 %439, %v410
        %v441 = vpop.permute.xlu0 %440
        %444 = vset.pattern.permute.xlu0 0
        %445 = vperm.xlu0 %444, %v411
        %v446 = vpop.permute.xlu0 %445
        %449 = vset.pattern.permute.xlu0 0
        %450 = vperm.xlu0 %449, %v412
        %v451 = vpop.permute.xlu0 %450
        %454 = vset.pattern.permute.xlu0 0
        %455 = vperm.xlu0 %454, %v413
        %v456 = vpop.permute.xlu0 %455
        %459 = vset.pattern.permute.xlu0 0
        %460 = vperm.xlu0 %459, %v414
        %v461 = vpop.permute.xlu0 %460
        %464 = vset.pattern.permute.xlu0 0
        %465 = vperm.xlu0 %464, %v415
        %v466 = vpop.permute.xlu0 %465
        %469 = vset.pattern.permute.xlu0 0
        %470 = vperm.xlu0 %469, %v416
        %v471 = vpop.permute.xlu0 %470
        %474 = vset.pattern.permute.xlu0 0
        %475 = vperm.xlu0 %474, %v417
        %v476 = vpop.permute.xlu0 %475
        %479 = vset.pattern.permute.xlu0 0
        %480 = vperm.xlu0 %479, %v418
        %v481 = vpop.permute.xlu0 %480
        %484 = vset.pattern.permute.xlu0 0
        %485 = vperm.xlu0 %484, %v419
        %v486 = vpop.permute.xlu0 %485
        %489 = vset.pattern.permute.xlu0 0
        %490 = vperm.xlu0 %489, %v420
        %v491 = vpop.permute.xlu0 %490
        %494 = vset.pattern.permute.xlu0 0
        %495 = vperm.xlu0 %494, %v421
        %v496 = vpop.permute.xlu0 %495
        %499 = vset.pattern.permute.xlu0 0
        %500 = vperm.xlu0 %499, %v422
        %v501 = vpop.permute.xlu0 %500
        %v503 = vmul.f32 %v391, %v426
        %v504 = vmul.f32 %v392, %v431
        %v505 = vmul.f32 %v393, %v436
        %v506 = vmul.f32 %v394, %v441
        %v507 = vmul.f32 %v395, %v446
        %v508 = vmul.f32 %v396, %v451
        %v509 = vmul.f32 %v397, %v456
        %v510 = vmul.f32 %v398, %v461
        %v511 = vmul.f32 %v399, %v466
        %v512 = vmul.f32 %v400, %v471
        %v513 = vmul.f32 %v401, %v476
        %v514 = vmul.f32 %v402, %v481
        %v515 = vmul.f32 %v403, %v486
        %v516 = vmul.f32 %v404, %v491
        %v517 = vmul.f32 %v405, %v496
        %v518 = vmul.f32 %v406, %v501
        %v519 = vld [vmem:[%s3] sm:$0xff]
        %v520 = vld [vmem:[%s3 + $0x8] sm:$0xff]
        %v521 = vld [vmem:[%s3 + $0x10] sm:$0xff]
        %v522 = vld [vmem:[%s3 + $0x18] sm:$0xff]
        %v523 = vld [vmem:[%s3 + $0x20] sm:$0xff]
        %v524 = vld [vmem:[%s3 + $0x28] sm:$0xff]
        %v525 = vld [vmem:[%s3 + $0x30] sm:$0xff]
        %v526 = vld [vmem:[%s3 + $0x38] sm:$0xff]
        %v527 = vld [vmem:[%s3 + $0x40] sm:$0xff]
        %v528 = vld [vmem:[%s3 + $0x48] sm:$0xff]
        %v529 = vld [vmem:[%s3 + $0x50] sm:$0xff]
        %v530 = vld [vmem:[%s3 + $0x58] sm:$0xff]
        %v531 = vld [vmem:[%s3 + $0x60] sm:$0xff]
        %v532 = vld [vmem:[%s3 + $0x68] sm:$0xff]
        %v533 = vld [vmem:[%s3 + $0x70] sm:$0xff]
        %v534 = vld [vmem:[%s3 + $0x78] sm:$0xff]
        %536 = vset.pattern.permute.xlu0 0
        %537 = vperm.xlu0 %536, %v519
        %v538 = vpop.permute.xlu0 %537
        %541 = vset.pattern.permute.xlu0 0
        %542 = vperm.xlu0 %541, %v520
        %v543 = vpop.permute.xlu0 %542
        %546 = vset.pattern.permute.xlu0 0
        %547 = vperm.xlu0 %546, %v521
        %v548 = vpop.permute.xlu0 %547
        %551 = vset.pattern.permute.xlu0 0
        %552 = vperm.xlu0 %551, %v522
        %v553 = vpop.permute.xlu0 %552
        %556 = vset.pattern.permute.xlu0 0
        %557 = vperm.xlu0 %556, %v523
        %v558 = vpop.permute.xlu0 %557
        %561 = vset.pattern.permute.xlu0 0
        %562 = vperm.xlu0 %561, %v524
        %v563 = vpop.permute.xlu0 %562
        %566 = vset.pattern.permute.xlu0 0
        %567 = vperm.xlu0 %566, %v525
        %v568 = vpop.permute.xlu0 %567
        %571 = vset.pattern.permute.xlu0 0
        %572 = vperm.xlu0 %571, %v526
        %v573 = vpop.permute.xlu0 %572
        %576 = vset.pattern.permute.xlu0 0
        %577 = vperm.xlu0 %576, %v527
        %v578 = vpop.permute.xlu0 %577
        %581 = vset.pattern.permute.xlu0 0
        %582 = vperm.xlu0 %581, %v528
        %v583 = vpop.permute.xlu0 %582
        %586 = vset.pattern.permute.xlu0 0
        %587 = vperm.xlu0 %586, %v529
        %v588 = vpop.permute.xlu0 %587
        %591 = vset.pattern.permute.xlu0 0
        %592 = vperm.xlu0 %591, %v530
        %v593 = vpop.permute.xlu0 %592
        %596 = vset.pattern.permute.xlu0 0
        %597 = vperm.xlu0 %596, %v531
        %v598 = vpop.permute.xlu0 %597
        %601 = vset.pattern.permute.xlu0 0
        %602 = vperm.xlu0 %601, %v532
        %v603 = vpop.permute.xlu0 %602
        %606 = vset.pattern.permute.xlu0 0
        %607 = vperm.xlu0 %606, %v533
        %v608 = vpop.permute.xlu0 %607
        %611 = vset.pattern.permute.xlu0 0
        %612 = vperm.xlu0 %611, %v534
        %v613 = vpop.permute.xlu0 %612
        %v615 = vadd.f32 %v503, %v538
        %v616 = vadd.f32 %v504, %v543
        %v617 = vadd.f32 %v505, %v548
        %v618 = vadd.f32 %v506, %v553
        %v619 = vadd.f32 %v507, %v558
        %v620 = vadd.f32 %v508, %v563
        %v621 = vadd.f32 %v509, %v568
        %v622 = vadd.f32 %v510, %v573
        %v623 = vadd.f32 %v511, %v578
        %v624 = vadd.f32 %v512, %v583
        %v625 = vadd.f32 %v513, %v588
        %v626 = vadd.f32 %v514, %v593
        %v627 = vadd.f32 %v515, %v598
        %v628 = vadd.f32 %v516, %v603
        %v629 = vadd.f32 %v517, %v608
        %v630 = vadd.f32 %v518, %v613
        %vm631 = vcmp.gt.f32.partialorder %v615, 0.0
        %vm632 = vcmp.gt.f32.partialorder %v616, 0.0
        %vm633 = vcmp.gt.f32.partialorder %v617, 0.0
        %vm634 = vcmp.gt.f32.partialorder %v618, 0.0
        %vm635 = vcmp.gt.f32.partialorder %v619, 0.0
        %vm636 = vcmp.gt.f32.partialorder %v620, 0.0
        %vm637 = vcmp.gt.f32.partialorder %v621, 0.0
        %vm638 = vcmp.gt.f32.partialorder %v622, 0.0
        %vm639 = vcmp.gt.f32.partialorder %v623, 0.0
        %vm640 = vcmp.gt.f32.partialorder %v624, 0.0
        %vm641 = vcmp.gt.f32.partialorder %v625, 0.0
        %vm642 = vcmp.gt.f32.partialorder %v626, 0.0
        %vm643 = vcmp.gt.f32.partialorder %v627, 0.0
        %vm644 = vcmp.gt.f32.partialorder %v628, 0.0
        %vm645 = vcmp.gt.f32.partialorder %v629, 0.0
        %vm646 = vcmp.gt.f32.partialorder %v630, 0.0
        %v647 = vmul.f32 %v615, 0.01
        %v648 = vmul.f32 %v616, 0.01
        %v649 = vmul.f32 %v617, 0.01
        %v650 = vmul.f32 %v618, 0.01
        %v651 = vmul.f32 %v619, 0.01
        %v652 = vmul.f32 %v620, 0.01
        %v653 = vmul.f32 %v621, 0.01
        %v654 = vmul.f32 %v622, 0.01
        %v655 = vmul.f32 %v623, 0.01
        %v656 = vmul.f32 %v624, 0.01
        %v657 = vmul.f32 %v625, 0.01
        %v658 = vmul.f32 %v626, 0.01
        %v659 = vmul.f32 %v627, 0.01
        %v660 = vmul.f32 %v628, 0.01
        %v661 = vmul.f32 %v629, 0.01
        %v662 = vmul.f32 %v630, 0.01
        %v663 = vsel %vm631, %v615, %v647
        %v664 = vsel %vm632, %v616, %v648
        %v665 = vsel %vm633, %v617, %v649
        %v666 = vsel %vm634, %v618, %v650
        %v667 = vsel %vm635, %v619, %v651
        %v668 = vsel %vm636, %v620, %v652
        %v669 = vsel %vm637, %v621, %v653
        %v670 = vsel %vm638, %v622, %v654
        %v671 = vsel %vm639, %v623, %v655
        %v672 = vsel %vm640, %v624, %v656
        %v673 = vsel %vm641, %v625, %v657
        %v674 = vsel %vm642, %v626, %v658
        %v675 = vsel %vm643, %v627, %v659
        %v676 = vsel %vm644, %v628, %v660
        %v677 = vsel %vm645, %v629, %v661
        %v678 = vsel %vm646, %v630, %v662
        %v679 = vpack.c.bf16 %v664, %v663
        %v680 = vpack.c.bf16 %v666, %v665
        %v681 = vpack.c.bf16 %v668, %v667
        %v682 = vpack.c.bf16 %v670, %v669
        %v683 = vpack.c.bf16 %v672, %v671
        %v684 = vpack.c.bf16 %v674, %v673
        %v685 = vpack.c.bf16 %v676, %v675
        %v686 = vpack.c.bf16 %v678, %v677
        %v687 = vld [vmem:[%s1] sm:$0x3]
        %688 = vmatprep.subr.bf16.mxu0 0
        %689 = vmatpush1.bf16.msra.mxu0 %v686
        %690 = vmatprep.subr.bf16.mxu0 0
        %691 = vmatpush1.bf16.msra.mxu0 %v685
        %692 = vmatprep.subr.bf16.mxu0 0
        %693 = vmatpush1.bf16.msra.mxu0 %v684
        %694 = vmatprep.subr.bf16.mxu0 0
        %695 = vmatpush1.bf16.msra.mxu0 %v683
        %696 = vmatprep.subr.bf16.mxu0 0
        %697 = vmatpush1.bf16.msra.mxu0 %v682
        %698 = vmatprep.subr.bf16.mxu0 0
        %699 = vmatpush1.bf16.msra.mxu0 %v681
        %700 = vmatprep.subr.bf16.mxu0 0
        %701 = vmatpush1.bf16.msra.mxu0 %v680
        %702 = vmatprep.subr.bf16.mxu0 0
        %703 = vmatpush1.bf16.msra.mxu0 %v679
        %704 = vmatprep.subr.bf16.mxu0 0
        %705 = vmatpush2.bf16.msra.mxu0 0
        %706 = vmatprep.subr.bf16.mxu0 0
        %707 = vmatpush2.bf16.msra.mxu0 0
        %708 = vmatprep.subr.bf16.mxu0 0
        %709 = vmatpush2.bf16.msra.mxu0 0
        %710 = vmatprep.subr.bf16.mxu0 0
        %711 = vmatpush2.bf16.msra.mxu0 0
        %712 = vmatprep.subr.bf16.mxu0 0
        %713 = vmatpush2.bf16.msra.mxu0 0
        %714 = vmatprep.subr.bf16.mxu0 0
        %715 = vmatpush2.bf16.msra.mxu0 0
        %716 = vmatprep.subr.bf16.mxu0 0
        %717 = vmatpush2.bf16.msra.mxu0 0
        %718 = vmatprep.subr.bf16.mxu0 0
        %719 = vmatpush2.bf16.msra.mxu0 0
        %720 = vmatprep.mubr.bf16.mxu0 0
        %721 = vmatmul.mubr.bf16.gmra.mxu0 %v687
        %v722 = vpop.f32.mrf.mxu0
        %v723 = vadd.f32 0.0, %v722
        %v724 = vpop.f32.mrf.mxu0
        %v725 = vpop.f32.mrf.mxu0
        %v726 = vpop.f32.mrf.mxu0
        %727 = vdwg.mxu0
        %v728 = vpack.c.bf16 %v723, %v723
        %729 = vst [vmem:[%s365] sm:$0x3] %v728
        %vm730 = vcmask 1043456
        %v731 = vsel %vm730, %v723, 0.0
        %732 = vadd.xlane.f32.xlu0 %v731
        %v733 = vpop.xlane.xlu0 %732
        %vm734 = vcmask 3072
        %735 = vst.msk [vmem:[%s369] sm:$0xf] %vm734, %v733
        %v736 = vmul.f32 %v723, %v723
        %v737 = vsel %vm730, %v736, 0.0
        %738 = vadd.xlane.f32.xlu0 %v737
        %v739 = vpop.xlane.xlu0 %738
        %740 = vst.msk [vmem:[%s373] sm:$0xf] %vm734, %v739
        %p741 = scmp.lt.s32.totalorder %s18, 3
        %s742 = scalar_select %p741, %s18, 3
        %s743 = smul.addr %s742, 2
        %s744 = scalar_lea.vmem %s4, %s743
        %p745 = scmp.lt.s32.totalorder %s18, 3
        %s746 = scalar_select %p745, %s18, 3
        %s747 = smul.addr %s746, 4
        %s748 = scalar_lea.vmem %s5, %s747
        %p749 = scmp.lt.s32.totalorder %s18, 3
        %s750 = scalar_select %p749, %s18, 3
        %s751 = smul.addr %s750, 4
        %s752 = scalar_lea.vmem %s6, %s751
        // Predicated region
        $region78: #{up_forward.4} parent=72 // pred_check
          %p753 = pneg %p125
        $region79: #{up_forward.4} parent=72 // pred_check_branch
          %755 = sbr.rel (%p753) target = $region81
        $region80: #{up_forward.4} parent=72 // pred_region
          _
        $region81: #{up_forward.4} parent=72 // pred_fallthru
          _
        // Predicated region
        $region82: #{up_forward.4} parent=72 // pred_check
          %p756 = pneg %p151
        $region83: #{up_forward.4} parent=72 // pred_check_branch
          %758 = sbr.rel (%p756) target = $region85
        $region84: #{up_forward.4} parent=72 // pred_region
          _
        $region85: #{up_forward.4} parent=72 // pred_fallthru
          _
        // Predicated region
        $region86: #{up_forward.4} parent=72 // pred_check
          %p759 = pneg %p177
        $region87: #{up_forward.4} parent=72 // pred_check_branch
          %761 = sbr.rel (%p759) target = $region89
        $region88: #{up_forward.4} parent=72 // pred_region
          _
        $region89: #{up_forward.4} parent=72 // pred_fallthru
          _
      $region73: #{up_forward.4} parent=5 // pred_fallthru
        _
      %p762 = scmp.le.s32.totalorder 2, %s13
      // Predicated region
      $region90: #{up_forward.4} parent=5 // pred_check
        %p763 = pneg %p762
      $region91: #{up_forward.4} parent=5 // pred_check_branch
        %765 = sbr.rel (%p763) target = $region93
      $region92: #{up_forward.4} parent=5 // pred_region
        %s766 = ssub.s32 %s13, 2
        // Predicated region
        $region94: #{up_forward.4} parent=92 // pred_check
          %p767 = pneg %p131
        $region95: #{up_forward.4} parent=92 // pred_check_branch
          %769 = sbr.rel (%p767) target = $region97
        $region96: #{up_forward.4} parent=92 // pred_region
          %p770 = scmp.lt.s32.totalorder %s19, 3
          %s771 = scalar_select %p770, %s19, 3
          %s772 = smul.addr %s771, 2
          %s773 = scalar_lea.vmem %s4, %s772
        $region97: #{up_forward.4} parent=92 // pred_fallthru
          _
        // Predicated region
        $region98: #{up_forward.4} parent=92 // pred_check
          %p774 = pneg %p157
        $region99: #{up_forward.4} parent=92 // pred_check_branch
          %776 = sbr.rel (%p774) target = $region101
        $region100: #{up_forward.4} parent=92 // pred_region
          %p777 = scmp.lt.s32.totalorder %s19, 3
          %s778 = scalar_select %p777, %s19, 3
          %s779 = smul.addr %s778, 4
          %s780 = scalar_lea.vmem %s5, %s779
        $region101: #{up_forward.4} parent=92 // pred_fallthru
          _
        // Predicated region
        $region102: #{up_forward.4} parent=92 // pred_check
          %p781 = pneg %p183
        $region103: #{up_forward.4} parent=92 // pred_check_branch
          %783 = sbr.rel (%p781) target = $region105
        $region104: #{up_forward.4} parent=92 // pred_region
          %p784 = scmp.lt.s32.totalorder %s19, 3
          %s785 = scalar_select %p784, %s19, 3
          %s786 = smul.addr %s785, 4
          %s787 = scalar_lea.vmem %s6, %s786
        $region105: #{up_forward.4} parent=92 // pred_fallthru
          _
      $region93: #{up_forward.4} parent=5 // pred_fallthru
        _
    $region6: #{up_forward.4} parent=1 // loop_footer
      %s17 = sadd.s32 1, %s13
    $region7: #{up_forward.4} parent=1 // loop_footer_branch
      %12 = sbr.rel target = $region3
    $region8: #{up_forward.4} parent=1 // loop_exit
      _

</llo_original>
